<compile_context>
chip_gen: v7x
topology: tpu7x:2x2x1
jax: 0.10.0
libtpu: 0.0.40
codegen_flags: <defaults>
</compile_context>

<pallas_src>
import math
import functools

import jax
import jax.numpy as jnp
from jax import lax
from jax.experimental import pallas as pl
from jax.experimental.pallas import tpu as pltpu


# ----------------------------------------------------------------------------
# Fused kernel
# ----------------------------------------------------------------------------
def _fused_mha_kernel(q_ref, k_ref, v_ref, m_ref,
                      wqkv_ref, bqkv_ref, wo_ref, bo_ref,
                      o_ref,
                      kproj_ref, vproj_ref, ctx_ref,
                      *, h, d_k, scale, has_mask):
    D = h * d_k

    wqkv = wqkv_ref[...]                              # (D, 3D) bf16 (pre-cast)
    bqkv = bqkv_ref[...]                              # (1, 3D) f32

    # ---- K/V projections: computed once per batch (first q-tile) and cached in
    #      VMEM scratch; all later q-tiles of this batch reuse them.
    @pl.when(pl.program_id(1) == 0)
    def _():
        xk = k_ref[...]                               # (Lk, D) bf16
        xv = v_ref[...]
        kp = jnp.dot(xk, wqkv[:, D:2 * D],
                     preferred_element_type=jnp.float32) + bqkv[:, D:2 * D]
        vp = jnp.dot(xv, wqkv[:, 2 * D:3 * D],
                     preferred_element_type=jnp.float32) + bqkv[:, 2 * D:3 * D]
        kproj_ref[...] = kp.astype(jnp.bfloat16)
        vproj_ref[...] = vp.astype(jnp.bfloat16)

    # ---- Q projection for this q-tile; 1/sqrt(d_k) folded into q once.
    q = jnp.dot(q_ref[...], wqkv[:, 0:D],
                preferred_element_type=jnp.float32) + bqkv[:, 0:D]
    q = (q * jnp.float32(scale)).astype(jnp.bfloat16)  # (TQ, D)

    kp = kproj_ref[...]                               # (Lk, D) bf16
    vp = vproj_ref[...]                               # (Lk, D) bf16

    if has_mask:
        # Additive bias precomputed in the wrapper (0 / -1e9), stored bf16.
        mbias = m_ref[...].astype(jnp.float32)        # (Lm, Lk), Lm in {1, TQ}

    dn = (((1,), (1,)), ((), ()))                     # contract last dims (no k.T)

    # Per-head attention; per-head context written into the (TQ, D) scratch so
    # the output projection below is ONE full-D GEMM. h is small -> static unroll.
    for hh in range(h):
        lo = hh * d_k
        qh = q[:, lo:lo + d_k]                        # (TQ, d_k) bf16
        kh = kp[:, lo:lo + d_k]                       # (Lk, d_k) bf16
        vh = vp[:, lo:lo + d_k]                       # (Lk, d_k) bf16

        s = lax.dot_general(qh, kh, dn,
                            preferred_element_type=jnp.float32)       # (TQ, Lk)
        if has_mask:
            s = s + mbias

        # Numerically stable softmax in f32 (v5e has no bf16 VPU/EUP);
        # normalization via EUP approx reciprocal (separate bundle slot).
        smax = jnp.max(s, axis=-1, keepdims=True)
        e = jnp.exp(s - smax)
        p = e * pl.reciprocal(jnp.sum(e, axis=-1, keepdims=True), approx=True)

        ctx_ref[:, lo:lo + d_k] = jnp.dot(
            p.astype(jnp.bfloat16), vh,
            preferred_element_type=jnp.float32).astype(jnp.bfloat16)   # (TQ, d_k)

    # ---- Output projection: single (TQ, D) @ (D, D) GEMM, lane-dense store.
    o_ref[...] = jnp.dot(ctx_ref[...], wo_ref[...],
                         preferred_element_type=jnp.float32) + bo_ref[...]


# ----------------------------------------------------------------------------
# Spec / compiler-param helpers
# ----------------------------------------------------------------------------
def _spec_single_buffered(block_shape, index_map):
    """Blocks that are invariant along the inner (qi) grid axis don't benefit
    from double-buffering; single-buffer them to halve their VMEM footprint
    (matters most on v7x's 64 MiB VMEM). Falls back gracefully if the
    pipeline_mode API is unavailable."""
    try:
        return pl.BlockSpec(block_shape, index_map, pipeline_mode=pl.Buffered(1))
    except (TypeError, AttributeError):
        return pl.BlockSpec(block_shape, index_map)


def _vmem_limit_bytes():
    # Default scoped VMEM (16/32 MiB) is too small at realistic d_model / Lk;
    # raise it while leaving headroom under physical capacity (64 MiB on v7x,
    # 128 MiB on v5e/v6e).
    try:
        cap = pltpu.get_tpu_info().vmem_capacity_bytes
        return int(min(cap - (12 << 20), 100 << 20))
    except Exception:
        return 48 << 20


# ----------------------------------------------------------------------------
# One-time parameter prep (hoisted out of the forward)
# ----------------------------------------------------------------------------
def prepare_mha_params(params):
    """Stack Wq/Wk/Wv into one bf16 (D, 3D) slab, cast Wo to bf16, keep biases
    f32. Done once, not per forward call."""
    d_model = params["wq"].shape[0]
    wqkv = jnp.concatenate([params["wq"], params["wk"], params["wv"]],
                           axis=1).astype(jnp.bfloat16)                  # (D, 3D)
    bqkv = jnp.concatenate([params["bq"], params["bk"], params["bv"]]
                           ).reshape(1, 3 * d_model).astype(jnp.float32)  # (1, 3D)
    return {
        "wqkv": wqkv,
        "bqkv": bqkv,
        "wo": params["wo"].astype(jnp.bfloat16),                          # (D, D)
        "bo": params["bo"].reshape(1, d_model).astype(jnp.float32),       # (1, D)
    }


# ----------------------------------------------------------------------------
# Wrapper
# ----------------------------------------------------------------------------
def multi_headed_attention(prep_params, query, key, value, h, mask=None):
    """query/key/value: [B, L, d_model] f32 (cast to bf16 MXU feeds internally).
    mask: [B, 1, Lk] or [B, Lq, Lk]; nonzero/True means 'mask out'
    (matches the module's torch masked_fill(mask=mask, value=-1e9))."""
    B, Lq, D = query.shape
    Lk = key.shape[1]
    assert D % h == 0
    d_k = D // h

    # q tile sized for the 256-wide MXU on v6e/v7x; single tile at toy shapes.
    TQ = Lq if Lq <= 256 else 256
    assert Lq % TQ == 0, "Lq must be a multiple of the q-tile size"
    nq = Lq // TQ

    # bf16 activations: halves in-kernel DMA bytes and the VMEM residency of
    # the K/V slabs. (In a real model the activations would already be bf16.)
    qb = query.astype(jnp.bfloat16)
    kb = key.astype(jnp.bfloat16)
    vb = value.astype(jnp.bfloat16)

    # Precompute the additive mask bias once (bf16: half the mask traffic, and
    # no per-step cmp+select inside the kernel).
    has_mask = mask is not None
    if has_mask:
        mbias = jnp.where(mask != 0, jnp.float32(-1e9),
                          jnp.float32(0.0)).astype(jnp.bfloat16)
    else:
        mbias = jnp.zeros((B, 1, Lk), jnp.bfloat16)   # never read by the kernel
    Lm = mbias.shape[1]
    if Lm == 1:                     # encoder-style broadcast mask [B, 1, Lk]
        m_spec = pl.BlockSpec((None, 1, Lk), lambda b, qi: (b, 0, 0))
    else:                           # decoder-style [B, Lq, Lk] mask, tiled with q
        assert Lm == Lq
        m_spec = pl.BlockSpec((None, TQ, Lk), lambda b, qi: (b, qi, 0))

    kernel = functools.partial(_fused_mha_kernel, h=h, d_k=d_k,
                               scale=1.0 / math.sqrt(d_k), has_mask=has_mask)

    return pl.pallas_call(
        kernel,
        out_shape=jax.ShapeDtypeStruct((B, Lq, D), jnp.float32),
        grid=(B, nq),
        in_specs=[
            pl.BlockSpec((None, TQ, D), lambda b, qi: (b, qi, 0)),          # q tile
            _spec_single_buffered((None, Lk, D), lambda b, qi: (b, 0, 0)),  # K slab
            _spec_single_buffered((None, Lk, D), lambda b, qi: (b, 0, 0)),  # V slab
            m_spec,                                                         # mask bias
            _spec_single_buffered((D, 3 * D), lambda b, qi: (0, 0)),        # Wqkv (bf16)
            _spec_single_buffered((1, 3 * D), lambda b, qi: (0, 0)),        # bqkv (f32)
            _spec_single_buffered((D, D), lambda b, qi: (0, 0)),            # Wo (bf16)
            _spec_single_buffered((1, D), lambda b, qi: (0, 0)),            # bo (f32)
        ],
        out_specs=pl.BlockSpec((None, TQ, D), lambda b, qi: (b, qi, 0)),
        scratch_shapes=[
            pltpu.VMEM((Lk, D), jnp.bfloat16),   # cached projected K (per batch)
            pltpu.VMEM((Lk, D), jnp.bfloat16),   # cached projected V (per batch)
            pltpu.VMEM((TQ, D), jnp.bfloat16),   # merged per-head context
        ],
        compiler_params=pltpu.CompilerParams(
            # qi must be sequential ('arbitrary') so the K/V projections cached
            # at qi==0 are valid for the remaining q-tiles of the batch; the
            # batch axis stays 'parallel' for v7x megacore sharding.
            dimension_semantics=("parallel", "arbitrary"),
            vmem_limit_bytes=_vmem_limit_bytes()),
    )(qb, kb, vb, mbias,
      prep_params["wqkv"], prep_params["bqkv"],
      prep_params["wo"], prep_params["bo"])


# ----------------------------------------------------------------------------
# Parameter init (torch-like uniform for 4 Linear(d_model, d_model) layers)
# ----------------------------------------------------------------------------
def init_mha_params(key, h, d_model):
    bound = 1.0 / math.sqrt(d_model)
    params = {}
    names = ("q", "k", "v", "o")
    keys = jax.random.split(key, 8)
    for i, n in enumerate(names):
        # stored as (in, out) so kernels compute x @ W
        params[f"w{n}"] = jax.random.uniform(
            keys[2 * i], (d_model, d_model), jnp.float32, -bound, bound)
        params[f"b{n}"] = jax.random.uniform(
            keys[2 * i + 1], (d_model,), jnp.float32, -bound, bound)
    return params


# ----------------------------------------------------------------------------
# Pure-JAX f32 reference (correctness sanity check)
# ----------------------------------------------------------------------------
def reference_mha(params, query, key, value, h, mask=None):
    B, Lq, D = query.shape
    d_k = D // h

    def proj(x, w, b):
        L = x.shape[1]
        y = x.reshape(B * L, D) @ w + b
        return y.reshape(B, L, h, d_k).transpose(0, 2, 1, 3)

    q = proj(query, params["wq"], params["bq"])
    k = proj(key, params["wk"], params["bk"])
    v = proj(value, params["wv"], params["bv"])
    scores = jnp.einsum("bhqd,bhkd->bhqk", q, k) / math.sqrt(d_k)
    if mask is not None:
        m = mask.astype(jnp.float32)[:, None, :, :]
        scores = jnp.where(m > 0.0, -1e9, scores)   # torch: masked_fill(mask=mask, -1e9)
    p = jax.nn.softmax(scores, axis=-1)
    x = jnp.einsum("bhqk,bhkd->bhqd", p, v)
    x = x.transpose(0, 2, 1, 3).reshape(B * Lq, D)
    return (x @ params["wo"] + params["bo"]).reshape(B, Lq, D)


# ----------------------------------------------------------------------------
if __name__ == "__main__":
    B, L, D, H = 2, 8, 32, 4  # d_k = 8

    root = jax.random.PRNGKey(0)
    kp, kq, kk, kv = jax.random.split(root, 4)

    params = init_mha_params(kp, H, D)
    prep = prepare_mha_params(params)          # one-time prep, not per forward

    query = jax.random.normal(kq, (B, L, D), jnp.float32)
    key = jax.random.normal(kk, (B, L, D), jnp.float32)
    value = jax.random.normal(kv, (B, L, D), jnp.float32)
    # encoder-style mask [B, 1, L]: mask out the last two key positions of batch 1
    mask = jnp.zeros((B, 1, L), jnp.float32).at[1, 0, -2:].set(1.0)

    out = multi_headed_attention(prep, query, key, value, H, mask=mask)
    out = jax.block_until_ready(out)
    assert out.shape == (B, L, D)

    # bf16 MXU feeds + approx reciprocal => looser tolerance vs the f32 reference
    ref = reference_mha(params, query, key, value, H, mask=mask)
    assert jnp.allclose(out, ref, atol=2e-2, rtol=2e-2), "mismatch vs reference (masked)"

    # also exercise the no-mask path
    out2 = jax.block_until_ready(
        multi_headed_attention(prep, query, key, value, H, mask=None))
    ref2 = reference_mha(params, query, key, value, H, mask=None)
    assert jnp.allclose(out2, ref2, atol=2e-2, rtol=2e-2), "mismatch vs reference (no mask)"

    print("KERNEL_OK")
</pallas_src>

<mosaic_0001>
module attributes {stable_mosaic.version = 11 : i64} {
  func.func @_fused_mha_kernel(%arg0: i32, %arg1: i32, %arg2: memref<1x8x32xbf16, #tpu.memory_space<vmem>>, %arg3: memref<1x8x32xbf16, #tpu.memory_space<vmem>>, %arg4: memref<1x8x32xbf16, #tpu.memory_space<vmem>>, %arg5: memref<1x1x8xbf16, #tpu.memory_space<vmem>>, %arg6: memref<32x96xbf16, #tpu.memory_space<vmem>>, %arg7: memref<1x96xf32, #tpu.memory_space<vmem>>, %arg8: memref<32x32xbf16, #tpu.memory_space<vmem>>, %arg9: memref<1x32xf32, #tpu.memory_space<vmem>>, %arg10: memref<1x8x32xf32, #tpu.memory_space<vmem>>, %arg11: memref<8x32xbf16, #tpu.memory_space<vmem>>, %arg12: memref<8x32xbf16, #tpu.memory_space<vmem>>, %arg13: memref<8x32xbf16, #tpu.memory_space<vmem>>) attributes {dimension_semantics = [#tpu.dimension_semantics<parallel>, #tpu.dimension_semantics<arbitrary>], iteration_bounds = array<i64: 2, 1>, scalar_prefetch = 0 : i64, scratch_operands = 3 : i64, tpu.core_type = #tpu.core_type<tc>, window_params = [{transform_indices = @transform_0, window_bounds = array<i64: 1, 8, 32>}, {pipeline_mode = #tpu.pipeline_mode<synchronous>, transform_indices = @transform_1, window_bounds = array<i64: 1, 8, 32>}, {pipeline_mode = #tpu.pipeline_mode<synchronous>, transform_indices = @transform_2, window_bounds = array<i64: 1, 8, 32>}, {transform_indices = @transform_3, window_bounds = array<i64: 1, 1, 8>}, {pipeline_mode = #tpu.pipeline_mode<synchronous>, transform_indices = @transform_4, window_bounds = array<i64: 32, 96>}, {pipeline_mode = #tpu.pipeline_mode<synchronous>, transform_indices = @transform_5, window_bounds = array<i64: 1, 96>}, {pipeline_mode = #tpu.pipeline_mode<synchronous>, transform_indices = @transform_6, window_bounds = array<i64: 32, 32>}, {pipeline_mode = #tpu.pipeline_mode<synchronous>, transform_indices = @transform_7, window_bounds = array<i64: 1, 32>}, {transform_indices = @transform_8, window_bounds = array<i64: 1, 8, 32>}]} {
    %c0 = arith.constant 0 : index
    %c0_0 = arith.constant 0 : index
    %0 = vector.load %arg6[%c0, %c0_0] : memref<32x96xbf16, #tpu.memory_space<vmem>>, vector<32x96xbf16>
    %c0_1 = arith.constant 0 : index
    %c0_2 = arith.constant 0 : index
    %1 = vector.load %arg7[%c0_1, %c0_2] : memref<1x96xf32, #tpu.memory_space<vmem>>, vector<1x96xf32>
    %c0_i32 = arith.constant 0 : i32
    %2 = arith.cmpi eq, %arg1, %c0_i32 : i32
    %3 = arith.extui %2 : i1 to i32
    %c0_i32_3 = arith.constant 0 : i32
    %4 = arith.cmpi ne, %3, %c0_i32_3 : i32
    scf.if %4 {
      %c0_46 = arith.constant 0 : index
      %c0_47 = arith.constant 0 : index
      %c0_48 = arith.constant 0 : index
      %109 = vector.load %arg3[%c0_46, %c0_47, %c0_48] : memref<1x8x32xbf16, #tpu.memory_space<vmem>>, vector<1x8x32xbf16>
      %110 = vector.shape_cast %109 : vector<1x8x32xbf16> to vector<8x32xbf16>
      %c0_49 = arith.constant 0 : index
      %c0_50 = arith.constant 0 : index
      %c0_51 = arith.constant 0 : index
      %111 = vector.load %arg4[%c0_49, %c0_50, %c0_51] : memref<1x8x32xbf16, #tpu.memory_space<vmem>>, vector<1x8x32xbf16>
      %112 = vector.shape_cast %111 : vector<1x8x32xbf16> to vector<8x32xbf16>
      %113 = vector.extract_strided_slice %0 {offsets = [0, 32], sizes = [32, 32], strides = [1, 1]} : vector<32x96xbf16> to vector<32x32xbf16>
      %cst_52 = arith.constant dense<0.000000e+00> : vector<8x32xf32>
      %114 = tpu.matmul %110, %113, %cst_52 {dimension_numbers = #tpu.dot_dimension_numbers<[1], [0], [0], [1], [0, 0, 1, 1], [], []>} : vector<8x32xbf16>, vector<32x32xbf16>, vector<8x32xf32> -> vector<8x32xf32>
      %115 = vector.extract_strided_slice %1 {offsets = [0, 32], sizes = [1, 32], strides = [1, 1]} : vector<1x96xf32> to vector<1x32xf32>
      %116 = vector.broadcast %115 : vector<1x32xf32> to vector<8x32xf32>
      %117 = arith.addf %114, %116 : vector<8x32xf32>
      %118 = vector.extract_strided_slice %0 {offsets = [0, 64], sizes = [32, 32], strides = [1, 1]} : vector<32x96xbf16> to vector<32x32xbf16>
      %cst_53 = arith.constant dense<0.000000e+00> : vector<8x32xf32>
      %119 = tpu.matmul %112, %118, %cst_53 {dimension_numbers = #tpu.dot_dimension_numbers<[1], [0], [0], [1], [0, 0, 1, 1], [], []>} : vector<8x32xbf16>, vector<32x32xbf16>, vector<8x32xf32> -> vector<8x32xf32>
      %120 = vector.extract_strided_slice %1 {offsets = [0, 64], sizes = [1, 32], strides = [1, 1]} : vector<1x96xf32> to vector<1x32xf32>
      %121 = vector.broadcast %120 : vector<1x32xf32> to vector<8x32xf32>
      %122 = arith.addf %119, %121 : vector<8x32xf32>
      %123 = arith.truncf %117 : vector<8x32xf32> to vector<8x32xbf16>
      %c0_54 = arith.constant 0 : index
      %c0_55 = arith.constant 0 : index
      %124 = vector.load %arg11[%c0_54, %c0_55] : memref<8x32xbf16, #tpu.memory_space<vmem>>, vector<8x32xbf16>
      tpu.vector_store %arg11[%c0_54, %c0_55], %123 {strides = array<i32>} : memref<8x32xbf16, #tpu.memory_space<vmem>>, vector<8x32xbf16>,
      %125 = arith.truncf %122 : vector<8x32xf32> to vector<8x32xbf16>
      %c0_56 = arith.constant 0 : index
      %c0_57 = arith.constant 0 : index
      %126 = vector.load %arg12[%c0_56, %c0_57] : memref<8x32xbf16, #tpu.memory_space<vmem>>, vector<8x32xbf16>
      tpu.vector_store %arg12[%c0_56, %c0_57], %125 {strides = array<i32>} : memref<8x32xbf16, #tpu.memory_space<vmem>>, vector<8x32xbf16>,
    } else {
    }
    %c0_4 = arith.constant 0 : index
    %c0_5 = arith.constant 0 : index
    %c0_6 = arith.constant 0 : index
    %5 = vector.load %arg2[%c0_4, %c0_5, %c0_6] : memref<1x8x32xbf16, #tpu.memory_space<vmem>>, vector<1x8x32xbf16>
    %6 = vector.shape_cast %5 : vector<1x8x32xbf16> to vector<8x32xbf16>
    %7 = vector.extract_strided_slice %0 {offsets = [0, 0], sizes = [32, 32], strides = [1, 1]} : vector<32x96xbf16> to vector<32x32xbf16>
    %cst = arith.constant dense<0.000000e+00> : vector<8x32xf32>
    %8 = tpu.matmul %6, %7, %cst {dimension_numbers = #tpu.dot_dimension_numbers<[1], [0], [0], [1], [0, 0, 1, 1], [], []>} : vector<8x32xbf16>, vector<32x32xbf16>, vector<8x32xf32> -> vector<8x32xf32>
    %9 = vector.extract_strided_slice %1 {offsets = [0, 0], sizes = [1, 32], strides = [1, 1]} : vector<1x96xf32> to vector<1x32xf32>
    %10 = vector.broadcast %9 : vector<1x32xf32> to vector<8x32xf32>
    %11 = arith.addf %8, %10 : vector<8x32xf32>
    %cst_7 = arith.constant 0.353553385 : f32
    %12 = vector.broadcast %cst_7 : f32 to vector<8x32xf32>
    %13 = arith.mulf %11, %12 : vector<8x32xf32>
    %14 = arith.truncf %13 : vector<8x32xf32> to vector<8x32xbf16>
    %c0_8 = arith.constant 0 : index
    %c0_9 = arith.constant 0 : index
    %15 = vector.load %arg11[%c0_8, %c0_9] : memref<8x32xbf16, #tpu.memory_space<vmem>>, vector<8x32xbf16>
    %c0_10 = arith.constant 0 : index
    %c0_11 = arith.constant 0 : index
    %16 = vector.load %arg12[%c0_10, %c0_11] : memref<8x32xbf16, #tpu.memory_space<vmem>>, vector<8x32xbf16>
    %c0_12 = arith.constant 0 : index
    %c0_13 = arith.constant 0 : index
    %c0_14 = arith.constant 0 : index
    %17 = vector.load %arg5[%c0_12, %c0_13, %c0_14] : memref<1x1x8xbf16, #tpu.memory_space<vmem>>, vector<1x1x8xbf16>
    %18 = vector.shape_cast %17 : vector<1x1x8xbf16> to vector<1x8xbf16>
    %19 = arith.extf %18 : vector<1x8xbf16> to vector<1x8xf32>
    %20 = vector.extract_strided_slice %14 {offsets = [0, 0], sizes = [8, 8], strides = [1, 1]} : vector<8x32xbf16> to vector<8x8xbf16>
    %21 = vector.extract_strided_slice %15 {offsets = [0, 0], sizes = [8, 8], strides = [1, 1]} : vector<8x32xbf16> to vector<8x8xbf16>
    %22 = vector.extract_strided_slice %16 {offsets = [0, 0], sizes = [8, 8], strides = [1, 1]} : vector<8x32xbf16> to vector<8x8xbf16>
    %cst_15 = arith.constant dense<0.000000e+00> : vector<8x8xf32>
    %23 = tpu.matmul %20, %21, %cst_15 {dimension_numbers = #tpu.dot_dimension_numbers<[1], [1], [0], [0], [0, 0, 1, 0], [], []>} : vector<8x8xbf16>, vector<8x8xbf16>, vector<8x8xf32> -> vector<8x8xf32>
    %24 = vector.broadcast %19 : vector<1x8xf32> to vector<8x8xf32>
    %25 = arith.addf %23, %24 : vector<8x8xf32>
    %cst_16 = arith.constant dense<0xFF800000> : vector<8xf32>
    %26 = vector.multi_reduction <maximumf>, %25, %cst_16 [1] : vector<8x8xf32> to vector<8xf32>
    %27 = vector.shape_cast %26 : vector<8xf32> to vector<8x1xf32>
    %28 = vector.broadcast %27 : vector<8x1xf32> to vector<8x8xf32>
    %29 = arith.subf %25, %28 : vector<8x8xf32>
    %30 = math.exp %29 : vector<8x8xf32>
    %cst_17 = arith.constant dense<0.000000e+00> : vector<8xf32>
    %31 = vector.multi_reduction <add>, %30, %cst_17 [1] : vector<8x8xf32> to vector<8xf32>
    %32 = vector.shape_cast %31 : vector<8xf32> to vector<8x1xf32>
    %33 = tpu.reciprocal %32 {approx = true} : vector<8x1xf32> -> vector<8x1xf32>
    %34 = vector.broadcast %33 : vector<8x1xf32> to vector<8x8xf32>
    %35 = arith.mulf %30, %34 : vector<8x8xf32>
    %36 = arith.truncf %35 : vector<8x8xf32> to vector<8x8xbf16>
    %cst_18 = arith.constant dense<0.000000e+00> : vector<8x8xf32>
    %37 = tpu.matmul %36, %22, %cst_18 {dimension_numbers = #tpu.dot_dimension_numbers<[1], [0], [0], [1], [0, 0, 1, 1], [], []>} : vector<8x8xbf16>, vector<8x8xbf16>, vector<8x8xf32> -> vector<8x8xf32>
    %38 = arith.truncf %37 : vector<8x8xf32> to vector<8x8xbf16>
    %c0_19 = arith.constant 0 : index
    %c0_20 = arith.constant 0 : index
    %39 = vector.load %arg13[%c0_19, %c0_20] : memref<8x32xbf16, #tpu.memory_space<vmem>>, vector<8x8xbf16>
    tpu.vector_store %arg13[%c0_19, %c0_20], %38 {strides = array<i32>} : memref<8x32xbf16, #tpu.memory_space<vmem>>, vector<8x8xbf16>,
    %40 = vector.extract_strided_slice %14 {offsets = [0, 8], sizes = [8, 8], strides = [1, 1]} : vector<8x32xbf16> to vector<8x8xbf16>
    %41 = vector.extract_strided_slice %15 {offsets = [0, 8], sizes = [8, 8], strides = [1, 1]} : vector<8x32xbf16> to vector<8x8xbf16>
    %42 = vector.extract_strided_slice %16 {offsets = [0, 8], sizes = [8, 8], strides = [1, 1]} : vector<8x32xbf16> to vector<8x8xbf16>
    %cst_21 = arith.constant dense<0.000000e+00> : vector<8x8xf32>
    %43 = tpu.matmul %40, %41, %cst_21 {dimension_numbers = #tpu.dot_dimension_numbers<[1], [1], [0], [0], [0, 0, 1, 0], [], []>} : vector<8x8xbf16>, vector<8x8xbf16>, vector<8x8xf32> -> vector<8x8xf32>
    %44 = vector.broadcast %19 : vector<1x8xf32> to vector<8x8xf32>
    %45 = arith.addf %43, %44 : vector<8x8xf32>
    %cst_22 = arith.constant dense<0xFF800000> : vector<8xf32>
    %46 = vector.multi_reduction <maximumf>, %45, %cst_22 [1] : vector<8x8xf32> to vector<8xf32>
    %47 = vector.shape_cast %46 : vector<8xf32> to vector<8x1xf32>
    %48 = vector.broadcast %47 : vector<8x1xf32> to vector<8x8xf32>
    %49 = arith.subf %45, %48 : vector<8x8xf32>
    %50 = math.exp %49 : vector<8x8xf32>
    %cst_23 = arith.constant dense<0.000000e+00> : vector<8xf32>
    %51 = vector.multi_reduction <add>, %50, %cst_23 [1] : vector<8x8xf32> to vector<8xf32>
    %52 = vector.shape_cast %51 : vector<8xf32> to vector<8x1xf32>
    %53 = tpu.reciprocal %52 {approx = true} : vector<8x1xf32> -> vector<8x1xf32>
    %54 = vector.broadcast %53 : vector<8x1xf32> to vector<8x8xf32>
    %55 = arith.mulf %50, %54 : vector<8x8xf32>
    %56 = arith.truncf %55 : vector<8x8xf32> to vector<8x8xbf16>
    %cst_24 = arith.constant dense<0.000000e+00> : vector<8x8xf32>
    %57 = tpu.matmul %56, %42, %cst_24 {dimension_numbers = #tpu.dot_dimension_numbers<[1], [0], [0], [1], [0, 0, 1, 1], [], []>} : vector<8x8xbf16>, vector<8x8xbf16>, vector<8x8xf32> -> vector<8x8xf32>
    %58 = arith.truncf %57 : vector<8x8xf32> to vector<8x8xbf16>
    %c0_25 = arith.constant 0 : index
    %c8 = arith.constant 8 : index
    %59 = vector.load %arg13[%c0_25, %c8] : memref<8x32xbf16, #tpu.memory_space<vmem>>, vector<8x8xbf16>
    tpu.vector_store %arg13[%c0_25, %c8], %58 {strides = array<i32>} : memref<8x32xbf16, #tpu.memory_space<vmem>>, vector<8x8xbf16>,
    %60 = vector.extract_strided_slice %14 {offsets = [0, 16], sizes = [8, 8], strides = [1, 1]} : vector<8x32xbf16> to vector<8x8xbf16>
    %61 = vector.extract_strided_slice %15 {offsets = [0, 16], sizes = [8, 8], strides = [1, 1]} : vector<8x32xbf16> to vector<8x8xbf16>
    %62 = vector.extract_strided_slice %16 {offsets = [0, 16], sizes = [8, 8], strides = [1, 1]} : vector<8x32xbf16> to vector<8x8xbf16>
    %cst_26 = arith.constant dense<0.000000e+00> : vector<8x8xf32>
    %63 = tpu.matmul %60, %61, %cst_26 {dimension_numbers = #tpu.dot_dimension_numbers<[1], [1], [0], [0], [0, 0, 1, 0], [], []>} : vector<8x8xbf16>, vector<8x8xbf16>, vector<8x8xf32> -> vector<8x8xf32>
    %64 = vector.broadcast %19 : vector<1x8xf32> to vector<8x8xf32>
    %65 = arith.addf %63, %64 : vector<8x8xf32>
    %cst_27 = arith.constant dense<0xFF800000> : vector<8xf32>
    %66 = vector.multi_reduction <maximumf>, %65, %cst_27 [1] : vector<8x8xf32> to vector<8xf32>
    %67 = vector.shape_cast %66 : vector<8xf32> to vector<8x1xf32>
    %68 = vector.broadcast %67 : vector<8x1xf32> to vector<8x8xf32>
    %69 = arith.subf %65, %68 : vector<8x8xf32>
    %70 = math.exp %69 : vector<8x8xf32>
    %cst_28 = arith.constant dense<0.000000e+00> : vector<8xf32>
    %71 = vector.multi_reduction <add>, %70, %cst_28 [1] : vector<8x8xf32> to vector<8xf32>
    %72 = vector.shape_cast %71 : vector<8xf32> to vector<8x1xf32>
    %73 = tpu.reciprocal %72 {approx = true} : vector<8x1xf32> -> vector<8x1xf32>
    %74 = vector.broadcast %73 : vector<8x1xf32> to vector<8x8xf32>
    %75 = arith.mulf %70, %74 : vector<8x8xf32>
    %76 = arith.truncf %75 : vector<8x8xf32> to vector<8x8xbf16>
    %cst_29 = arith.constant dense<0.000000e+00> : vector<8x8xf32>
    %77 = tpu.matmul %76, %62, %cst_29 {dimension_numbers = #tpu.dot_dimension_numbers<[1], [0], [0], [1], [0, 0, 1, 1], [], []>} : vector<8x8xbf16>, vector<8x8xbf16>, vector<8x8xf32> -> vector<8x8xf32>
    %78 = arith.truncf %77 : vector<8x8xf32> to vector<8x8xbf16>
    %c0_30 = arith.constant 0 : index
    %c16 = arith.constant 16 : index
    %79 = vector.load %arg13[%c0_30, %c16] : memref<8x32xbf16, #tpu.memory_space<vmem>>, vector<8x8xbf16>
    tpu.vector_store %arg13[%c0_30, %c16], %78 {strides = array<i32>} : memref<8x32xbf16, #tpu.memory_space<vmem>>, vector<8x8xbf16>,
    %80 = vector.extract_strided_slice %14 {offsets = [0, 24], sizes = [8, 8], strides = [1, 1]} : vector<8x32xbf16> to vector<8x8xbf16>
    %81 = vector.extract_strided_slice %15 {offsets = [0, 24], sizes = [8, 8], strides = [1, 1]} : vector<8x32xbf16> to vector<8x8xbf16>
    %82 = vector.extract_strided_slice %16 {offsets = [0, 24], sizes = [8, 8], strides = [1, 1]} : vector<8x32xbf16> to vector<8x8xbf16>
    %cst_31 = arith.constant dense<0.000000e+00> : vector<8x8xf32>
    %83 = tpu.matmul %80, %81, %cst_31 {dimension_numbers = #tpu.dot_dimension_numbers<[1], [1], [0], [0], [0, 0, 1, 0], [], []>} : vector<8x8xbf16>, vector<8x8xbf16>, vector<8x8xf32> -> vector<8x8xf32>
    %84 = vector.broadcast %19 : vector<1x8xf32> to vector<8x8xf32>
    %85 = arith.addf %83, %84 : vector<8x8xf32>
    %cst_32 = arith.constant dense<0xFF800000> : vector<8xf32>
    %86 = vector.multi_reduction <maximumf>, %85, %cst_32 [1] : vector<8x8xf32> to vector<8xf32>
    %87 = vector.shape_cast %86 : vector<8xf32> to vector<8x1xf32>
    %88 = vector.broadcast %87 : vector<8x1xf32> to vector<8x8xf32>
    %89 = arith.subf %85, %88 : vector<8x8xf32>
    %90 = math.exp %89 : vector<8x8xf32>
    %cst_33 = arith.constant dense<0.000000e+00> : vector<8xf32>
    %91 = vector.multi_reduction <add>, %90, %cst_33 [1] : vector<8x8xf32> to vector<8xf32>
    %92 = vector.shape_cast %91 : vector<8xf32> to vector<8x1xf32>
    %93 = tpu.reciprocal %92 {approx = true} : vector<8x1xf32> -> vector<8x1xf32>
    %94 = vector.broadcast %93 : vector<8x1xf32> to vector<8x8xf32>
    %95 = arith.mulf %90, %94 : vector<8x8xf32>
    %96 = arith.truncf %95 : vector<8x8xf32> to vector<8x8xbf16>
    %cst_34 = arith.constant dense<0.000000e+00> : vector<8x8xf32>
    %97 = tpu.matmul %96, %82, %cst_34 {dimension_numbers = #tpu.dot_dimension_numbers<[1], [0], [0], [1], [0, 0, 1, 1], [], []>} : vector<8x8xbf16>, vector<8x8xbf16>, vector<8x8xf32> -> vector<8x8xf32>
    %98 = arith.truncf %97 : vector<8x8xf32> to vector<8x8xbf16>
    %c0_35 = arith.constant 0 : index
    %c24 = arith.constant 24 : index
    %99 = vector.load %arg13[%c0_35, %c24] : memref<8x32xbf16, #tpu.memory_space<vmem>>, vector<8x8xbf16>
    tpu.vector_store %arg13[%c0_35, %c24], %98 {strides = array<i32>} : memref<8x32xbf16, #tpu.memory_space<vmem>>, vector<8x8xbf16>,
    %c0_36 = arith.constant 0 : index
    %c0_37 = arith.constant 0 : index
    %100 = vector.load %arg13[%c0_36, %c0_37] : memref<8x32xbf16, #tpu.memory_space<vmem>>, vector<8x32xbf16>
    %c0_38 = arith.constant 0 : index
    %c0_39 = arith.constant 0 : index
    %101 = vector.load %arg8[%c0_38, %c0_39] : memref<32x32xbf16, #tpu.memory_space<vmem>>, vector<32x32xbf16>
    %cst_40 = arith.constant dense<0.000000e+00> : vector<8x32xf32>
    %102 = tpu.matmul %100, %101, %cst_40 {dimension_numbers = #tpu.dot_dimension_numbers<[1], [0], [0], [1], [0, 0, 1, 1], [], []>} : vector<8x32xbf16>, vector<32x32xbf16>, vector<8x32xf32> -> vector<8x32xf32>
    %c0_41 = arith.constant 0 : index
    %c0_42 = arith.constant 0 : index
    %103 = vector.load %arg9[%c0_41, %c0_42] : memref<1x32xf32, #tpu.memory_space<vmem>>, vector<1x32xf32>
    %104 = vector.broadcast %103 : vector<1x32xf32> to vector<8x32xf32>
    %105 = arith.addf %102, %104 : vector<8x32xf32>
    %c0_43 = arith.constant 0 : index
    %c0_44 = arith.constant 0 : index
    %c0_45 = arith.constant 0 : index
    %106 = vector.load %arg10[%c0_43, %c0_44, %c0_45] : memref<1x8x32xf32, #tpu.memory_space<vmem>>, vector<1x8x32xf32>
    %107 = vector.shape_cast %106 : vector<1x8x32xf32> to vector<8x32xf32>
    %108 = vector.shape_cast %105 : vector<8x32xf32> to vector<1x8x32xf32>
    tpu.vector_store %arg10[%c0_43, %c0_44, %c0_45], %108 {strides = array<i32>} : memref<1x8x32xf32, #tpu.memory_space<vmem>>, vector<1x8x32xf32>,
    return
  }
  func.func @transform_0(%arg0: i32, %arg1: i32) -> (i32, i32, i32) {
    %c0_i32 = arith.constant 0 : i32
    %c0_i32_0 = arith.constant 0 : i32
    return %arg0, %arg1, %c0_i32 : i32, i32, i32
  }
  func.func @transform_1(%arg0: i32, %arg1: i32) -> (i32, i32, i32) {
    %c0_i32 = arith.constant 0 : i32
    %c0_i32_0 = arith.constant 0 : i32
    %c0_i32_1 = arith.constant 0 : i32
    return %arg0, %c0_i32, %c0_i32_0 : i32, i32, i32
  }
  func.func @transform_2(%arg0: i32, %arg1: i32) -> (i32, i32, i32) {
    %c0_i32 = arith.constant 0 : i32
    %c0_i32_0 = arith.constant 0 : i32
    %c0_i32_1 = arith.constant 0 : i32
    return %arg0, %c0_i32, %c0_i32_0 : i32, i32, i32
  }
  func.func @transform_3(%arg0: i32, %arg1: i32) -> (i32, i32, i32) {
    %c0_i32 = arith.constant 0 : i32
    %c0_i32_0 = arith.constant 0 : i32
    %c0_i32_1 = arith.constant 0 : i32
    return %arg0, %c0_i32, %c0_i32_0 : i32, i32, i32
  }
  func.func @transform_4(%arg0: i32, %arg1: i32) -> (i32, i32) {
    %c0_i32 = arith.constant 0 : i32
    %c0_i32_0 = arith.constant 0 : i32
    %c0_i32_1 = arith.constant 0 : i32
    return %c0_i32, %c0_i32_0 : i32, i32
  }
  func.func @transform_5(%arg0: i32, %arg1: i32) -> (i32, i32) {
    %c0_i32 = arith.constant 0 : i32
    %c0_i32_0 = arith.constant 0 : i32
    %c0_i32_1 = arith.constant 0 : i32
    return %c0_i32, %c0_i32_0 : i32, i32
  }
  func.func @transform_6(%arg0: i32, %arg1: i32) -> (i32, i32) {
    %c0_i32 = arith.constant 0 : i32
    %c0_i32_0 = arith.constant 0 : i32
    %c0_i32_1 = arith.constant 0 : i32
    return %c0_i32, %c0_i32_0 : i32, i32
  }
  func.func @transform_7(%arg0: i32, %arg1: i32) -> (i32, i32) {
    %c0_i32 = arith.constant 0 : i32
    %c0_i32_0 = arith.constant 0 : i32
    %c0_i32_1 = arith.constant 0 : i32
    return %c0_i32, %c0_i32_0 : i32, i32
  }
  func.func @transform_8(%arg0: i32, %arg1: i32) -> (i32, i32, i32) {
    %c0_i32 = arith.constant 0 : i32
    %c0_i32_0 = arith.constant 0 : i32
    return %arg0, %arg1, %c0_i32 : i32, i32, i32
  }
}

</mosaic_0001>

<llo_original>
// kernel: tpu_custom_call.1
$region0: #{tpu_custom_call.1}
  #allocation0 [shape = 'u32[]', space=smem, size = 0x4, offset = 0x4, fixed_abs, tag = 'smem constant byte address 0x4 - core index']
  #allocation1 [shape = 'u32[144,128]{1,0:T(1,128)}', space=vmem, size = 0x12000, scoped, tag = 'internal scratch']
  #allocation2 [shape = 'bf16[8,32]{1,0:T(8,128)(2,1)}', space=vmem, size = 0x800, scoped, tag = 'scratch operand']
  #allocation3 [shape = 'bf16[8,32]{1,0:T(8,128)(2,1)}', space=vmem, size = 0x800, scoped, tag = 'scratch operand']
  #allocation4 [shape = 'bf16[8,32]{1,0:T(8,128)(2,1)}', space=vmem, size = 0x800, scoped, tag = 'scratch operand']
  %s0 = inlined_call_operand.hbm [shape: bf16[2,8,32], index: 0, kind: input, shape index: {}]
  %s1 = inlined_call_operand.hbm [shape: bf16[2,8,32], index: 1, kind: input, shape index: {}]
  %s2 = inlined_call_operand.hbm [shape: bf16[2,8,32], index: 2, kind: input, shape index: {}]
  %s3 = inlined_call_operand.vmem [shape: bf16[2,1,8], index: 3, kind: input, shape index: {}]
  %s4 = inlined_call_operand.vmem [shape: bf16[32,96], index: 4, kind: input, shape index: {}]
  %s5 = inlined_call_operand.vmem [shape: f32[1,96], index: 5, kind: input, shape index: {}]
  %s6 = inlined_call_operand.hbm [shape: bf16[32,32], index: 6, kind: input, shape index: {}]
  %s7 = inlined_call_operand.vmem [shape: f32[1,32], index: 7, kind: input, shape index: {}]
  %s8 = inlined_call_operand.hbm [shape: f32[2,8,32], index: 8, kind: output, shape index: {}]
  %s9 = sld [smem:[#allocation0]]
  $region85: #{tpu_custom_call.1} parent=0
    _
  %s11 = ssub.s32 1, %s9
  %s12 = scalar_select 0, %s11, %s9
  $region1: #{tpu_custom_call.1} parent=0
    #allocation5 [shape = 'u8[4096]{0}', space=vmem, size = 0x1000, scoped, tag = 'input window, operand 0']
    #allocation6 [shape = 's32[2]{0}', space=sflag, size = 0x8, scoped, tag = 'scoped memory for tpu_custom_call.1']
    #allocation7 [shape = 's32[2]{0}', space=sflag, size = 0x8, scoped, tag = 'scoped memory for tpu_custom_call.1']
    #allocation8 [shape = 'u8[2048]{0}', space=vmem, size = 0x800, scoped, tag = 'input window, operand 1, single buffered']
    #allocation9 [shape = 's32[1]{0}', space=sflag, size = 0x4, scoped, tag = 'scoped memory for tpu_custom_call.1']
    #allocation10 [shape = 'u8[2048]{0}', space=vmem, size = 0x800, scoped, tag = 'input window, operand 2, single buffered']
    #allocation11 [shape = 'u8[8192]{0}', space=vmem, size = 0x2000, scoped, tag = 'input window, operand 6, single buffered']
    #allocation12 [shape = 's32[1]{0}', space=sflag, size = 0x4, scoped, tag = 'scoped memory for tpu_custom_call.1']
    #allocation13 [shape = 'u8[8192]{0}', space=vmem, size = 0x2000, scoped, tag = 'output window, operand 0']
    %13 = vsyncpa [#allocation6], 0
    %s14 = scalar_lea.sflag [#allocation6], 1
    %15 = vsyncpa %s14, 0
    %16 = vsyncpa [#allocation9], 0
    %17 = vsyncpa [#allocation12], 0
    %18 = vsyncpa [#allocation7], 0
    %s19 = scalar_lea.sflag [#allocation7], 1
    %20 = vsyncpa %s19, 0
    loop: start=0, step=1, limit=4
    $region2: #{tpu_custom_call.1} parent=1 // loop_pre_header
      _
    $region3: #{tpu_custom_call.1} parent=1 // loop_header
      %s22 = sphi 0, %s26
      %p23 = scmp.ge.s32.totalorder %s22, 4
      %s29 = sphi 0, %s41
      %s30 = sphi 0, %s37
      %s31 = sphi 0, %s29
      %s32 = sphi 0, %s30
      %s33 = sphi 0, %s31
      %s34 = sphi 0, %s32
      %s46 = sphi 0, %s48
      %s49 = sphi 0, %s46
      %s50 = sphi 0, %s49
      %s66 = sphi 0, %s50
      %s72 = sphi 0, %s74
      %s75 = sphi 0, %s72
      %s76 = sphi 0, %s75
      %s92 = sphi 0, %s76
      %s98 = sphi 0, %s100
      %s101 = sphi 0, %s98
      %s102 = sphi 0, %s101
      %s118 = sphi 0, %s102
      %s124 = sphi 0, %s126
      %s127 = sphi 0, %s124
      %s128 = sphi 0, %s127
      %s144 = sphi 0, %s128
      %s148 = sphi 0, %s148
      %s150 = sphi 0, %s148
      %s151 = sphi 0, %s150
      %s165 = sphi 0, %s151
      %s169 = sphi 0, %s169
      %s171 = sphi 0, %s169
      %s172 = sphi 0, %s171
      %s186 = sphi 0, %s172
      %s190 = sphi 0, %s190
      %s192 = sphi 0, %s190
      %s193 = sphi 0, %s192
      %s207 = sphi 0, %s193
      %s211 = sphi 0, %s211
      %s213 = sphi 0, %s211
      %s214 = sphi 0, %s213
      %s228 = sphi 0, %s214
      %s236 = sphi 0, %s238
      %s239 = sphi 0, %s236
      %s240 = sphi 0, %s239
      %s256 = sphi 0, %s240
    $region4: #{tpu_custom_call.1} parent=1 // loop_header_branch
      %25 = sbr.rel (%p23) target = $region8
    $region5: #{tpu_custom_call.1} parent=1 // loop_body
      %s27 = ssub.s32 %s22, 1
      %s28 = ssub.s32 %s22, 2
      %s35 = sadd.s32 1, %s30
      %p36 = scmp.ge.s32.totalorder %s35, 1
      %s37 = scalar_select %p36, 0, %s35
      %s38 = sadd.s32 1, %s29
      %s39 = scalar_select %p36, %s38, %s29
      %p40 = scmp.ge.s32.totalorder %s39, 2
      %s41 = scalar_select %p40, 0, %s39
      %s42 = ssub.s32 %s29, %s41
      %s43 = ssub.s32 %s30, %s37
      %s44 = sor.u32 %s42, %s43
      %p45 = scmp.eq.s32.totalorder %s44, 0
      %s47 = sadd.s32 %s46, 1
      %s48 = scalar_select %p45, %s46, %s47
      %p51 = pneg %p45
      %p52 = scmp.eq.s32.totalorder %s22, 1
      %p53 = por %p51, %p52
      %p54 = scmp.ne.s32.totalorder %s46, %s49
      %p55 = scmp.eq.s32.totalorder %s22, 0
      %p56 = por %p54, %p55
      %p57 = scmp.ne.s32.totalorder %s46, %s49
      %p58 = scmp.eq.s32.totalorder %s27, 1
      %p59 = por %p57, %p58
      %p60 = scmp.ne.s32.totalorder %s49, %s50
      %p61 = scmp.eq.s32.totalorder %s27, 0
      %p62 = por %p60, %p61
      %p63 = scmp.ne.s32.totalorder %s49, %s50
      %p64 = scmp.eq.s32.totalorder %s28, 1
      %p65 = por %p63, %p64
      %p67 = scmp.ne.s32.totalorder %s50, %s66
      %p68 = scmp.eq.s32.totalorder %s28, 0
      %p69 = por %p67, %p68
      %s70 = ssub.s32 %s29, %s41
      %p71 = scmp.eq.s32.totalorder %s70, 0
      %s73 = sadd.s32 %s72, 1
      %s74 = scalar_select %p71, %s72, %s73
      %p77 = pneg %p71
      %p78 = scmp.eq.s32.totalorder %s22, 1
      %p79 = por %p77, %p78
      %p80 = scmp.ne.s32.totalorder %s72, %s75
      %p81 = scmp.eq.s32.totalorder %s22, 0
      %p82 = por %p80, %p81
      %p83 = scmp.ne.s32.totalorder %s72, %s75
      %p84 = scmp.eq.s32.totalorder %s27, 1
      %p85 = por %p83, %p84
      %p86 = scmp.ne.s32.totalorder %s75, %s76
      %p87 = scmp.eq.s32.totalorder %s27, 0
      %p88 = por %p86, %p87
      %p89 = scmp.ne.s32.totalorder %s75, %s76
      %p90 = scmp.eq.s32.totalorder %s28, 1
      %p91 = por %p89, %p90
      %p93 = scmp.ne.s32.totalorder %s76, %s92
      %p94 = scmp.eq.s32.totalorder %s28, 0
      %p95 = por %p93, %p94
      %s96 = ssub.s32 %s29, %s41
      %p97 = scmp.eq.s32.totalorder %s96, 0
      %s99 = sadd.s32 %s98, 1
      %s100 = scalar_select %p97, %s98, %s99
      %p103 = pneg %p97
      %p104 = scmp.eq.s32.totalorder %s22, 1
      %p105 = por %p103, %p104
      %p106 = scmp.ne.s32.totalorder %s98, %s101
      %p107 = scmp.eq.s32.totalorder %s22, 0
      %p108 = por %p106, %p107
      %p109 = scmp.ne.s32.totalorder %s98, %s101
      %p110 = scmp.eq.s32.totalorder %s27, 1
      %p111 = por %p109, %p110
      %p112 = scmp.ne.s32.totalorder %s101, %s102
      %p113 = scmp.eq.s32.totalorder %s27, 0
      %p114 = por %p112, %p113
      %p115 = scmp.ne.s32.totalorder %s101, %s102
      %p116 = scmp.eq.s32.totalorder %s28, 1
      %p117 = por %p115, %p116
      %p119 = scmp.ne.s32.totalorder %s102, %s118
      %p120 = scmp.eq.s32.totalorder %s28, 0
      %p121 = por %p119, %p120
      %s122 = ssub.s32 %s29, %s41
      %p123 = scmp.eq.s32.totalorder %s122, 0
      %s125 = sadd.s32 %s124, 1
      %s126 = scalar_select %p123, %s124, %s125
      %p129 = pneg %p123
      %p130 = scmp.eq.s32.totalorder %s22, 1
      %p131 = por %p129, %p130
      %p132 = scmp.ne.s32.totalorder %s124, %s127
      %p133 = scmp.eq.s32.totalorder %s22, 0
      %p134 = por %p132, %p133
      %p135 = scmp.ne.s32.totalorder %s124, %s127
      %p136 = scmp.eq.s32.totalorder %s27, 1
      %p137 = por %p135, %p136
      %p138 = scmp.ne.s32.totalorder %s127, %s128
      %p139 = scmp.eq.s32.totalorder %s27, 0
      %p140 = por %p138, %p139
      %p141 = scmp.ne.s32.totalorder %s127, %s128
      %p142 = scmp.eq.s32.totalorder %s28, 1
      %p143 = por %p141, %p142
      %p145 = scmp.ne.s32.totalorder %s128, %s144
      %p146 = scmp.eq.s32.totalorder %s28, 0
      %p147 = por %p145, %p146
      %s149 = sadd.s32 %s148, 1
      %p152 = scmp.eq.s32.totalorder %s22, 1
      %p153 = scmp.ne.s32.totalorder %s148, %s150
      %p154 = scmp.eq.s32.totalorder %s22, 0
      %p155 = por %p153, %p154
      %p156 = scmp.ne.s32.totalorder %s148, %s150
      %p157 = scmp.eq.s32.totalorder %s27, 1
      %p158 = por %p156, %p157
      %p159 = scmp.ne.s32.totalorder %s150, %s151
      %p160 = scmp.eq.s32.totalorder %s27, 0
      %p161 = por %p159, %p160
      %p162 = scmp.ne.s32.totalorder %s150, %s151
      %p163 = scmp.eq.s32.totalorder %s28, 1
      %p164 = por %p162, %p163
      %p166 = scmp.ne.s32.totalorder %s151, %s165
      %p167 = scmp.eq.s32.totalorder %s28, 0
      %p168 = por %p166, %p167
      %s170 = sadd.s32 %s169, 1
      %p173 = scmp.eq.s32.totalorder %s22, 1
      %p174 = scmp.ne.s32.totalorder %s169, %s171
      %p175 = scmp.eq.s32.totalorder %s22, 0
      %p176 = por %p174, %p175
      %p177 = scmp.ne.s32.totalorder %s169, %s171
      %p178 = scmp.eq.s32.totalorder %s27, 1
      %p179 = por %p177, %p178
      %p180 = scmp.ne.s32.totalorder %s171, %s172
      %p181 = scmp.eq.s32.totalorder %s27, 0
      %p182 = por %p180, %p181
      %p183 = scmp.ne.s32.totalorder %s171, %s172
      %p184 = scmp.eq.s32.totalorder %s28, 1
      %p185 = por %p183, %p184
      %p187 = scmp.ne.s32.totalorder %s172, %s186
      %p188 = scmp.eq.s32.totalorder %s28, 0
      %p189 = por %p187, %p188
      %s191 = sadd.s32 %s190, 1
      %p194 = scmp.eq.s32.totalorder %s22, 1
      %p195 = scmp.ne.s32.totalorder %s190, %s192
      %p196 = scmp.eq.s32.totalorder %s22, 0
      %p197 = por %p195, %p196
      %p198 = scmp.ne.s32.totalorder %s190, %s192
      %p199 = scmp.eq.s32.totalorder %s27, 1
      %p200 = por %p198, %p199
      %p201 = scmp.ne.s32.totalorder %s192, %s193
      %p202 = scmp.eq.s32.totalorder %s27, 0
      %p203 = por %p201, %p202
      %p204 = scmp.ne.s32.totalorder %s192, %s193
      %p205 = scmp.eq.s32.totalorder %s28, 1
      %p206 = por %p204, %p205
      %p208 = scmp.ne.s32.totalorder %s193, %s207
      %p209 = scmp.eq.s32.totalorder %s28, 0
      %p210 = por %p208, %p209
      %s212 = sadd.s32 %s211, 1
      %p215 = scmp.eq.s32.totalorder %s22, 1
      %p216 = scmp.ne.s32.totalorder %s211, %s213
      %p217 = scmp.eq.s32.totalorder %s22, 0
      %p218 = por %p216, %p217
      %p219 = scmp.ne.s32.totalorder %s211, %s213
      %p220 = scmp.eq.s32.totalorder %s27, 1
      %p221 = por %p219, %p220
      %p222 = scmp.ne.s32.totalorder %s213, %s214
      %p223 = scmp.eq.s32.totalorder %s27, 0
      %p224 = por %p222, %p223
      %p225 = scmp.ne.s32.totalorder %s213, %s214
      %p226 = scmp.eq.s32.totalorder %s28, 1
      %p227 = por %p225, %p226
      %p229 = scmp.ne.s32.totalorder %s214, %s228
      %p230 = scmp.eq.s32.totalorder %s28, 0
      %p231 = por %p229, %p230
      %s232 = ssub.s32 %s29, %s41
      %s233 = ssub.s32 %s30, %s37
      %s234 = sor.u32 %s232, %s233
      %p235 = scmp.eq.s32.totalorder %s234, 0
      %s237 = sadd.s32 %s236, 1
      %s238 = scalar_select %p235, %s236, %s237
      %p241 = pneg %p235
      %p242 = scmp.eq.s32.totalorder %s22, 1
      %p243 = por %p241, %p242
      %p244 = scmp.ne.s32.totalorder %s236, %s239
      %p245 = scmp.eq.s32.totalorder %s22, 0
      %p246 = por %p244, %p245
      %p247 = scmp.ne.s32.totalorder %s236, %s239
      %p248 = scmp.eq.s32.totalorder %s27, 1
      %p249 = por %p247, %p248
      %p250 = scmp.ne.s32.totalorder %s239, %s240
      %p251 = scmp.eq.s32.totalorder %s27, 0
      %p252 = por %p250, %p251
      %p253 = scmp.ne.s32.totalorder %s239, %s240
      %p254 = scmp.eq.s32.totalorder %s28, 1
      %p255 = por %p253, %p254
      %p257 = scmp.ne.s32.totalorder %s240, %s256
      %p258 = scmp.eq.s32.totalorder %s28, 0
      %p259 = por %p257, %p258
      %p260 = scmp.le.s32.totalorder 1, %s22
      %p261 = scmp.lt.s32.totalorder %s22, 3
      %p262 = pnand %p260, %p261
      %p263 = pneg %p262
      // Predicated region
      $region9: #{tpu_custom_call.1} parent=5 // pred_check
        _
      $region10: #{tpu_custom_call.1} parent=5 // pred_check_branch
        %265 = sbr.rel (%p262) target = $region12
      $region11: #{tpu_custom_call.1} parent=5 // pred_region
        %s266 = ssub.s32 %s22, 1
        // Predicated region
        $region13: #{tpu_custom_call.1} parent=11 // pred_check
          %p267 = pneg %p88
        $region14: #{tpu_custom_call.1} parent=11 // pred_check_branch
          %269 = sbr.rel (%p267) target = $region16
        $region15: #{tpu_custom_call.1} parent=11 // pred_region
          %s271 = ssub.s32 64, 64
          %272 = vsyncadd [#allocation9], %s271
          %s273 = smul.addr %s31, 64
          %s274 = scalar_lea.hbm %s1, %s273
          %s276 = sshll.u32 [#allocation8], 4
          %s277 = int_to_ptr.vmem [resolvable:$true] %s276
          %279 = dma.hbm_to_vmem [thread:$0]  %s274, 64, %s277, [#allocation9]
        $region16: #{tpu_custom_call.1} parent=11 // pred_fallthru
          _
        // Predicated region
        $region17: #{tpu_custom_call.1} parent=11 // pred_check
          %p280 = pneg %p114
        $region18: #{tpu_custom_call.1} parent=11 // pred_check_branch
          %282 = sbr.rel (%p280) target = $region20
        $region19: #{tpu_custom_call.1} parent=11 // pred_region
          %s284 = ssub.s32 64, 64
          %285 = vsyncadd [#allocation9], %s284
          %s286 = smul.addr %s31, 64
          %s287 = scalar_lea.hbm %s2, %s286
          %s289 = sshll.u32 [#allocation10], 4
          %s290 = int_to_ptr.vmem [resolvable:$true] %s289
          %292 = dma.hbm_to_vmem [thread:$0]  %s287, 64, %s290, [#allocation9]
        $region20: #{tpu_custom_call.1} parent=11 // pred_fallthru
          _
        // Predicated region
        $region21: #{tpu_custom_call.1} parent=11 // pred_check
          %p293 = pneg %p161
        $region22: #{tpu_custom_call.1} parent=11 // pred_check_branch
          %295 = sbr.rel (%p293) target = $region24
        $region23: #{tpu_custom_call.1} parent=11 // pred_region
          _
        $region24: #{tpu_custom_call.1} parent=11 // pred_fallthru
          _
        // Predicated region
        $region25: #{tpu_custom_call.1} parent=11 // pred_check
          %p296 = pneg %p182
        $region26: #{tpu_custom_call.1} parent=11 // pred_check_branch
          %298 = sbr.rel (%p296) target = $region28
        $region27: #{tpu_custom_call.1} parent=11 // pred_region
          _
        $region28: #{tpu_custom_call.1} parent=11 // pred_fallthru
          _
        // Predicated region
        $region29: #{tpu_custom_call.1} parent=11 // pred_check
          %p299 = pneg %p203
        $region30: #{tpu_custom_call.1} parent=11 // pred_check_branch
          %301 = sbr.rel (%p299) target = $region32
        $region31: #{tpu_custom_call.1} parent=11 // pred_region
          %s303 = ssub.s32 256, 256
          %304 = vsyncadd [#allocation12], %s303
          %s305 = sshll.u32 [#allocation11], 4
          %s306 = int_to_ptr.vmem [resolvable:$true] %s305
          %311 = dma.hbm_to_vmem [thread:$0]  %s6, 256, %s306, [#allocation12], 64, 64, 4
        $region32: #{tpu_custom_call.1} parent=11 // pred_fallthru
          _
        // Predicated region
        $region33: #{tpu_custom_call.1} parent=11 // pred_check
          %p312 = pneg %p224
        $region34: #{tpu_custom_call.1} parent=11 // pred_check_branch
          %314 = sbr.rel (%p312) target = $region36
        $region35: #{tpu_custom_call.1} parent=11 // pred_region
          _
        $region36: #{tpu_custom_call.1} parent=11 // pred_fallthru
          _
      $region12: #{tpu_custom_call.1} parent=5 // pred_fallthru
        _
      %p315 = scmp.lt.s32.totalorder %s22, 2
      // Predicated region
      $region37: #{tpu_custom_call.1} parent=5 // pred_check
        %p316 = pneg %p315
      $region38: #{tpu_custom_call.1} parent=5 // pred_check_branch
        %318 = sbr.rel (%p316) target = $region40
      $region39: #{tpu_custom_call.1} parent=5 // pred_region
        // Predicated region
        $region41: #{tpu_custom_call.1} parent=39 // pred_check
          %p319 = pneg %p56
        $region42: #{tpu_custom_call.1} parent=39 // pred_check_branch
          %321 = sbr.rel (%p319) target = $region44
        $region43: #{tpu_custom_call.1} parent=39 // pred_region
          %s322 = sand.u32 %s46, 1
          %s323 = scalar_lea.sflag [#allocation6], %s322
          %s324 = sand.u32 %s46, 1
          %s325 = smul.addr %s324, 4
          %s326 = scalar_lea.vmem [#allocation5], %s325
          %s328 = ssub.s32 64, 64
          %329 = vsyncadd %s323, %s328
          %s330 = sadd.s32 %s30, %s29
          %s331 = smul.addr %s330, 64
          %s332 = scalar_lea.hbm %s0, %s331
          %s334 = sshll.u32 %s326, 4
          %s335 = int_to_ptr.vmem [resolvable:$true] %s334
          %337 = dma.hbm_to_vmem [thread:$0]  %s332, 64, %s335, %s323
        $region44: #{tpu_custom_call.1} parent=39 // pred_fallthru
          _
        // Predicated region
        $region45: #{tpu_custom_call.1} parent=39 // pred_check
          %p338 = pneg %p134
        $region46: #{tpu_custom_call.1} parent=39 // pred_check_branch
          %340 = sbr.rel (%p338) target = $region48
        $region47: #{tpu_custom_call.1} parent=39 // pred_region
          %p341 = scmp.lt.s32.totalorder %s29, 1
          %s342 = scalar_select %p341, %s29, 1
          %s343 = scalar_lea.vmem %s3, %s342
        $region48: #{tpu_custom_call.1} parent=39 // pred_fallthru
          _
      $region40: #{tpu_custom_call.1} parent=5 // pred_fallthru
        _
      %p344 = scmp.le.s32.totalorder 1, %s22
      %p345 = scmp.lt.s32.totalorder %s22, 3
      %p346 = pnand %p344, %p345
      %p347 = pneg %p346
      // Predicated region
      $region49: #{tpu_custom_call.1} parent=5 // pred_check
        _
      $region50: #{tpu_custom_call.1} parent=5 // pred_check_branch
        %349 = sbr.rel (%p346) target = $region52
      $region51: #{tpu_custom_call.1} parent=5 // pred_region
        %s350 = ssub.s32 %s22, 1
        %s351 = sand.u32 %s49, 1
        %s352 = scalar_lea.sflag [#allocation6], %s351
        %s353 = sand.u32 %s49, 1
        %s354 = smul.addr %s353, 4
        %s355 = scalar_lea.vmem [#allocation5], %s354
        // Predicated region
        $region53: #{tpu_custom_call.1} parent=51 // pred_check
          %p356 = pneg %p62
        $region54: #{tpu_custom_call.1} parent=51 // pred_check_branch
          %358 = sbr.rel (%p356) target = $region56
        $region55: #{tpu_custom_call.1} parent=51 // pred_region
          %359 = dma.done %s352, 64
        $region56: #{tpu_custom_call.1} parent=51 // pred_fallthru
          _
        // Predicated region
        $region57: #{tpu_custom_call.1} parent=51 // pred_check
          %p360 = pneg %p88
        $region58: #{tpu_custom_call.1} parent=51 // pred_check_branch
          %362 = sbr.rel (%p360) target = $region60
        $region59: #{tpu_custom_call.1} parent=51 // pred_region
          %363 = dma.done [#allocation9], 64
        $region60: #{tpu_custom_call.1} parent=51 // pred_fallthru
          _
        // Predicated region
        $region61: #{tpu_custom_call.1} parent=51 // pred_check
          %p364 = pneg %p114
        $region62: #{tpu_custom_call.1} parent=51 // pred_check_branch
          %366 = sbr.rel (%p364) target = $region64
        $region63: #{tpu_custom_call.1} parent=51 // pred_region
          %367 = dma.done [#allocation9], 64
        $region64: #{tpu_custom_call.1} parent=51 // pred_fallthru
          _
        // Predicated region
        $region65: #{tpu_custom_call.1} parent=51 // pred_check
          %p368 = pneg %p203
        $region66: #{tpu_custom_call.1} parent=51 // pred_check_branch
          %370 = sbr.rel (%p368) target = $region68
        $region67: #{tpu_custom_call.1} parent=51 // pred_region
          %371 = dma.done [#allocation12], 256
        $region68: #{tpu_custom_call.1} parent=51 // pred_fallthru
          _
        %s372 = sand.u32 %s49, 1
        %s373 = scalar_lea.sflag [#allocation6], %s372
        %s374 = sand.u32 %s49, 1
        %s375 = smul.addr %s374, 4
        %s376 = scalar_lea.vmem [#allocation5], %s375
        %p377 = pneg %p62
        %p378 = pneg %p59
        %p379 = pneg %p88
        %p380 = pneg %p85
        %p381 = pneg %p114
        %p382 = pneg %p111
        %p383 = scmp.lt.s32.totalorder %s31, 1
        %s384 = scalar_select %p383, %s31, 1
        %s385 = scalar_lea.vmem %s3, %s384
        %p386 = pneg %p140
        %p387 = pneg %p137
        %p388 = pneg %p161
        %p389 = pneg %p158
        %p390 = pneg %p182
        %p391 = pneg %p179
        %p392 = pneg %p203
        %p393 = pneg %p200
        %p394 = pneg %p224
        %p395 = pneg %p221
        %p396 = pneg %p252
        %p397 = pneg %p249
        %s398 = sand.u32 %s239, 1
        %s399 = scalar_lea.sflag [#allocation7], %s398
        %s400 = sand.u32 %s239, 1
        %s401 = smul.addr %s400, 8
        %s402 = scalar_lea.vmem [#allocation13], %s401
        %p403 = scmp.lt.s32.totalorder %s31, 1
        %s404 = scalar_select %p403, %s31, 1
        %s405 = scalar_lea.vmem %s3, %s404
        %v407 = vld [vmem:[%s4] sm:$0xf]
        %v408 = vld [vmem:[%s4 + $0x4] sm:$0xf]
        %v409 = vld [vmem:[%s4 + $0x8] sm:$0xf]
        %v410 = vld [vmem:[%s4 + $0xc] sm:$0xf]
        %v411 = vld [vmem:[%s5] sm:$0x1]
        %p412 = scmp.eq.s32.totalorder %s32, 0
        // Predicated region
        $region69: #{tpu_custom_call.1} parent=51 // pred_check
          %p413 = pneg %p412
        $region70: #{tpu_custom_call.1} parent=51 // pred_check_branch
          %415 = sbr.rel (%p413) target = $region72
        $region71: #{tpu_custom_call.1} parent=51 // pred_region
          %v416 = vld [vmem:[#allocation8] sm:$0xf]
          %v417 = vld [vmem:[#allocation10] sm:$0xf]
          %v419 = vlaneseq
          %v420 = vshrl.u32 %v419, 7
          %v421 = vsub.s32 0, %v420
          %v422 = vrot.slane %v411, %v421
          %v427 = vunpack.c.l.b16 %v407
          %v428 = vunpack.c.l.b16 %v408
          %v429 = vunpack.c.l.b16 %v409
          %v430 = vunpack.c.l.b16 %v410
          %v431 = vpack.c.b16 %v428, %v427
          %v432 = vpack.c.b16 %v430, %v429
          %433 = vrot.lane.b32.xlu0 %v431, 96
          %v434 = vpop.permute.xlu0 %433
          %435 = vrot.lane.b32.xlu0 %v432, 96
          %v436 = vpop.permute.xlu0 %435
          %439 = vrot.lane.b32.xlu0 %v422, 96
          %v440 = vpop.permute.xlu0 %439
          %vm442 = vcmask 261120
          %v444 = vsel %vm442, %v416, 0
          %446 = vmatprep.subr.bf16.mxu0 0
          %447 = vmatpush1.bf16.msra.mxu0 %v434
          %448 = vmatprep.subr.bf16.mxu0 0
          %449 = vmatpush1.bf16.msra.mxu0 %v436
          %450 = vmatprep.subr.bf16.mxu0 0
          %451 = vmatpush1.bf16.msra.mxu0 0
          %452 = vmatprep.subr.bf16.mxu0 0
          %453 = vmatpush1.bf16.msra.mxu0 0
          %454 = vmatprep.subr.bf16.mxu0 0
          %455 = vmatpush1.bf16.msra.mxu0 0
          %456 = vmatprep.subr.bf16.mxu0 0
          %457 = vmatpush1.bf16.msra.mxu0 0
          %458 = vmatprep.subr.bf16.mxu0 0
          %459 = vmatpush1.bf16.msra.mxu0 0
          %460 = vmatprep.subr.bf16.mxu0 0
          %461 = vmatpush1.bf16.msra.mxu0 0
          %462 = vmatprep.subr.bf16.mxu0 0
          %463 = vmatpush1.bf16.msra.mxu0 0
          %464 = vmatprep.subr.bf16.mxu0 0
          %465 = vmatpush1.bf16.msra.mxu0 0
          %466 = vmatprep.subr.bf16.mxu0 0
          %467 = vmatpush1.bf16.msra.mxu0 0
          %468 = vmatprep.subr.bf16.mxu0 0
          %469 = vmatpush1.bf16.msra.mxu0 0
          %470 = vmatprep.subr.bf16.mxu0 0
          %471 = vmatpush1.bf16.msra.mxu0 0
          %472 = vmatprep.subr.bf16.mxu0 0
          %473 = vmatpush1.bf16.msra.mxu0 0
          %474 = vmatprep.subr.bf16.mxu0 0
          %475 = vmatpush1.bf16.msra.mxu0 0
          %476 = vmatprep.subr.bf16.mxu0 0
          %477 = vmatpush1.bf16.msra.mxu0 0
          %478 = vmatprep.mubr.bf16.mxu0 0
          %479 = vmatmul.mubr.bf16.gmra.mrb[0].mxu0 %v444
          %v480 = vpop.f32.mrb[0].mxu0
          %v481 = vadd.f32 %v440, %v480
          %v482 = vpop.f32.mrb[0].mxu0
          %v483 = vpop.f32.mrb[0].mxu0
          %v484 = vpop.f32.mrb[0].mxu0
          %485 = vdwg.mxu0
          %486 = vrot.lane.b32.xlu0 %v431, 64
          %v487 = vpop.permute.xlu0 %486
          %488 = vrot.lane.b32.xlu0 %v432, 64
          %v489 = vpop.permute.xlu0 %488
          %492 = vrot.lane.b32.xlu0 %v422, 64
          %v493 = vpop.permute.xlu0 %492
          %v496 = vsel %vm442, %v417, 0
          %498 = vmatprep.subr.bf16.mxu0 0
          %499 = vmatpush1.bf16.msra.mxu0 %v487
          %500 = vmatprep.subr.bf16.mxu0 0
          %501 = vmatpush1.bf16.msra.mxu0 %v489
          %502 = vmatprep.subr.bf16.mxu0 0
          %503 = vmatpush1.bf16.msra.mxu0 0
          %504 = vmatprep.subr.bf16.mxu0 0
          %505 = vmatpush1.bf16.msra.mxu0 0
          %506 = vmatprep.subr.bf16.mxu0 0
          %507 = vmatpush1.bf16.msra.mxu0 0
          %508 = vmatprep.subr.bf16.mxu0 0
          %509 = vmatpush1.bf16.msra.mxu0 0
          %510 = vmatprep.subr.bf16.mxu0 0
          %511 = vmatpush1.bf16.msra.mxu0 0
          %512 = vmatprep.subr.bf16.mxu0 0
          %513 = vmatpush1.bf16.msra.mxu0 0
          %514 = vmatprep.subr.bf16.mxu0 0
          %515 = vmatpush1.bf16.msra.mxu0 0
          %516 = vmatprep.subr.bf16.mxu0 0
          %517 = vmatpush1.bf16.msra.mxu0 0
          %518 = vmatprep.subr.bf16.mxu0 0
          %519 = vmatpush1.bf16.msra.mxu0 0
          %520 = vmatprep.subr.bf16.mxu0 0
          %521 = vmatpush1.bf16.msra.mxu0 0
          %522 = vmatprep.subr.bf16.mxu0 0
          %523 = vmatpush1.bf16.msra.mxu0 0
          %524 = vmatprep.subr.bf16.mxu0 0
          %525 = vmatpush1.bf16.msra.mxu0 0
          %526 = vmatprep.subr.bf16.mxu0 0
          %527 = vmatpush1.bf16.msra.mxu0 0
          %528 = vmatprep.subr.bf16.mxu0 0
          %529 = vmatpush1.bf16.msra.mxu0 0
          %530 = vmatprep.mubr.bf16.mxu0 0
          %531 = vmatmul.mubr.bf16.gmra.mrb[0].mxu0 %v496
          %v532 = vpop.f32.mrb[0].mxu0
          %v533 = vadd.f32 %v493, %v532
          %v534 = vpop.f32.mrb[0].mxu0
          %v535 = vpop.f32.mrb[0].mxu0
          %v536 = vpop.f32.mrb[0].mxu0
          %537 = vdwg.mxu0
          %v538 = vpack.c.bf16 %v481, %v481
          %vm539 = vcmask 257024
          %540 = vst.msk [vmem:[#allocation2] sm:$0xf] %vm539, %v538
          %v541 = vpack.c.bf16 %v533, %v533
          %542 = vst.msk [vmem:[#allocation3] sm:$0xf] %vm539, %v541
        $region72: #{tpu_custom_call.1} parent=51 // pred_fallthru
          _
        %v543 = vld [vmem:[%s355] sm:$0xf]
        %v545 = vlaneseq
        %v546 = vshrl.u32 %v545, 7
        %v547 = vsub.s32 0, %v546
        %v548 = vrot.slane %v411, %v547
        %v554 = vunpack.c.l.b16 %v407
        %v555 = vunpack.c.l.b16 %v408
        %v556 = vunpack.c.l.b16 %v409
        %v557 = vunpack.c.l.b16 %v410
        %v558 = vpack.c.b16 %v555, %v554
        %v559 = vpack.c.b16 %v557, %v556
        %vm562 = vcmask 261120
        %v564 = vsel %vm562, %v543, 0
        %566 = vmatprep.subr.bf16.mxu0 0
        %567 = vmatpush1.bf16.msra.mxu0 %v558
        %568 = vmatprep.subr.bf16.mxu0 0
        %569 = vmatpush1.bf16.msra.mxu0 %v559
        %570 = vmatprep.subr.bf16.mxu0 0
        %571 = vmatpush1.bf16.msra.mxu0 0
        %572 = vmatprep.subr.bf16.mxu0 0
        %573 = vmatpush1.bf16.msra.mxu0 0
        %574 = vmatprep.subr.bf16.mxu0 0
        %575 = vmatpush1.bf16.msra.mxu0 0
        %576 = vmatprep.subr.bf16.mxu0 0
        %577 = vmatpush1.bf16.msra.mxu0 0
        %578 = vmatprep.subr.bf16.mxu0 0
        %579 = vmatpush1.bf16.msra.mxu0 0
        %580 = vmatprep.subr.bf16.mxu0 0
        %581 = vmatpush1.bf16.msra.mxu0 0
        %582 = vmatprep.subr.bf16.mxu0 0
        %583 = vmatpush1.bf16.msra.mxu0 0
        %584 = vmatprep.subr.bf16.mxu0 0
        %585 = vmatpush1.bf16.msra.mxu0 0
        %586 = vmatprep.subr.bf16.mxu0 0
        %587 = vmatpush1.bf16.msra.mxu0 0
        %588 = vmatprep.subr.bf16.mxu0 0
        %589 = vmatpush1.bf16.msra.mxu0 0
        %590 = vmatprep.subr.bf16.mxu0 0
        %591 = vmatpush1.bf16.msra.mxu0 0
        %592 = vmatprep.subr.bf16.mxu0 0
        %593 = vmatpush1.bf16.msra.mxu0 0
        %594 = vmatprep.subr.bf16.mxu0 0
        %595 = vmatpush1.bf16.msra.mxu0 0
        %596 = vmatprep.subr.bf16.mxu0 0
        %597 = vmatpush1.bf16.msra.mxu0 0
        %598 = vmatprep.mubr.bf16.mxu0 0
        %599 = vmatmul.mubr.bf16.gmra.mrb[0].mxu0 %v564
        %v600 = vpop.f32.mrb[0].mxu0
        %v601 = vadd.f32 %v548, %v600
        %v602 = vpop.f32.mrb[0].mxu0
        %v603 = vpop.f32.mrb[0].mxu0
        %v604 = vpop.f32.mrb[0].mxu0
        %605 = vdwg.mxu0
        %v606 = vmul.f32 %v601, 0.35355338
        %v607 = vpack.c.bf16 %v606, %v606
        %v608 = vld [vmem:[#allocation2] sm:$0xf]
        %v609 = vld [vmem:[#allocation3] sm:$0xf]
        %v610 = vld [vmem:[%s405] sm:$0x1]
        %v611 = vunpack.c.l.bf16 %v610
        %v612 = vlaneseq
        %v613 = vshrl.u32 %v612, 7
        %v614 = vsub.s32 0, %v613
        %v615 = vrot.slane %v611, %v614
        %vm616 = vcmask 64512
        %v618 = vsel %vm616, %v607, 0
        %v621 = vsel %vm616, %v608, 0
        %623 = vmatprep.subr.bf16.mxu0 0
        %624 = vmatpush1.bf16.xpose.msra.mxu0 %v621
        %625 = vmatprep.subr.bf16.mxu0 0
        %626 = vmatpush1.bf16.xpose.msra.mxu0 0
        %627 = vmatprep.subr.bf16.mxu0 0
        %628 = vmatpush1.bf16.xpose.msra.mxu0 0
        %629 = vmatprep.subr.bf16.mxu0 0
        %630 = vmatpush1.bf16.xpose.msra.mxu0 0
        %631 = vmatprep.subr.bf16.mxu0 0
        %632 = vmatpush1.bf16.xpose.msra.mxu0 0
        %633 = vmatprep.subr.bf16.mxu0 0
        %634 = vmatpush1.bf16.xpose.msra.mxu0 0
        %635 = vmatprep.subr.bf16.mxu0 0
        %636 = vmatpush1.bf16.xpose.msra.mxu0 0
        %637 = vmatprep.subr.bf16.mxu0 0
        %638 = vmatpush1.bf16.xpose.msra.mxu0 0
        %639 = vmatprep.subr.bf16.mxu0 0
        %640 = vmatpush1.bf16.xpose.msra.mxu0 0
        %641 = vmatprep.subr.bf16.mxu0 0
        %642 = vmatpush1.bf16.xpose.msra.mxu0 0
        %643 = vmatprep.subr.bf16.mxu0 0
        %644 = vmatpush1.bf16.xpose.msra.mxu0 0
        %645 = vmatprep.subr.bf16.mxu0 0
        %646 = vmatpush1.bf16.xpose.msra.mxu0 0
        %647 = vmatprep.subr.bf16.mxu0 0
        %648 = vmatpush1.bf16.xpose.msra.mxu0 0
        %649 = vmatprep.subr.bf16.mxu0 0
        %650 = vmatpush1.bf16.xpose.msra.mxu0 0
        %651 = vmatprep.subr.bf16.mxu0 0
        %652 = vmatpush1.bf16.xpose.msra.mxu0 0
        %653 = vmatprep.subr.bf16.mxu0 0
        %654 = vmatpush1.bf16.xpose.msra.mxu0 0
        %655 = vmatprep.mubr.bf16.mxu0 0
        %656 = vmatmul.mubr.bf16.gmra.mrb[0].mxu0 %v618
        %v657 = vpop.f32.mrb[0].mxu0
        %v658 = vadd.f32 %v615, %v657
        %v659 = vpop.f32.mrb[0].mxu0
        %v660 = vpop.f32.mrb[0].mxu0
        %v661 = vpop.f32.mrb[0].mxu0
        %662 = vdwg.mxu0
        %v663 = vsel %vm616, %v658, -inf
        %664 = vmax.xlane.f32.xlu0 %v663
        %v665 = vpop.xlane.xlu0 %664
        %v666 = vsub.f32 %v658, %v665
        %v667 = vmul.f32 %v666, 1.442695
        %v668 = vpow.pop %v667
        %v669 = vsel %vm616, %v668, 0.0
        %670 = vadd.xlane.f32.xlu0 %v669
        %v671 = vpop.xlane.xlu0 %670
        %v672 = vrcp.pop %v671
        %v673 = vmul.f32 %v668, %v672
        %v674 = vpack.c.bf16 %v673, %v673
        %v676 = vsel %vm616, %v674, 0
        %vm678 = vcmask 1043456
        %v680 = vsel %vm678, %v609, 0
        %682 = vmatprep.subr.bf16.mxu0 0
        %683 = vmatpush1.bf16.msra.mxu0 %v680
        %684 = vmatprep.subr.bf16.mxu0 0
        %685 = vmatpush1.bf16.msra.mxu0 0
        %686 = vmatprep.subr.bf16.mxu0 0
        %687 = vmatpush1.bf16.msra.mxu0 0
        %688 = vmatprep.subr.bf16.mxu0 0
        %689 = vmatpush1.bf16.msra.mxu0 0
        %690 = vmatprep.subr.bf16.mxu0 0
        %691 = vmatpush1.bf16.msra.mxu0 0
        %692 = vmatprep.subr.bf16.mxu0 0
        %693 = vmatpush1.bf16.msra.mxu0 0
        %694 = vmatprep.subr.bf16.mxu0 0
        %695 = vmatpush1.bf16.msra.mxu0 0
        %696 = vmatprep.subr.bf16.mxu0 0
        %697 = vmatpush1.bf16.msra.mxu0 0
        %698 = vmatprep.subr.bf16.mxu0 0
        %699 = vmatpush1.bf16.msra.mxu0 0
        %700 = vmatprep.subr.bf16.mxu0 0
        %701 = vmatpush1.bf16.msra.mxu0 0
        %702 = vmatprep.subr.bf16.mxu0 0
        %703 = vmatpush1.bf16.msra.mxu0 0
        %704 = vmatprep.subr.bf16.mxu0 0
        %705 = vmatpush1.bf16.msra.mxu0 0
        %706 = vmatprep.subr.bf16.mxu0 0
        %707 = vmatpush1.bf16.msra.mxu0 0
        %708 = vmatprep.subr.bf16.mxu0 0
        %709 = vmatpush1.bf16.msra.mxu0 0
        %710 = vmatprep.subr.bf16.mxu0 0
        %711 = vmatpush1.bf16.msra.mxu0 0
        %712 = vmatprep.subr.bf16.mxu0 0
        %713 = vmatpush1.bf16.msra.mxu0 0
        %714 = vmatprep.mubr.bf16.mxu0 0
        %715 = vmatmul.mubr.bf16.gmra.mrb[0].mxu0 %v676
        %v716 = vpop.f32.mrb[0].mxu0
        %v717 = vadd.f32 0.0, %v716
        %v718 = vpop.f32.mrb[0].mxu0
        %v719 = vpop.f32.mrb[0].mxu0
        %v720 = vpop.f32.mrb[0].mxu0
        %721 = vdwg.mxu0
        %v722 = vpack.c.bf16 %v717, %v717
        %vm723 = vcmask 60416
        %724 = vst.msk [vmem:[#allocation4] sm:$0xf] %vm723, %v722
        %726 = vrot.lane.b32.xlu0 %v607, 120
        %v727 = vpop.permute.xlu0 %726
        %v729 = vunpack.c.l.b16 %v608
        %v730 = vpack.c.b16 %v729, %v729
        %731 = vrot.lane.b32.xlu0 %v730, 120
        %v732 = vpop.permute.xlu0 %731
        %v734 = vsel %vm616, %v727, 0
        %v737 = vsel %vm616, %v732, 0
        %739 = vmatprep.subr.bf16.mxu0 0
        %740 = vmatpush1.bf16.xpose.msra.mxu0 %v737
        %741 = vmatprep.subr.bf16.mxu0 0
        %742 = vmatpush1.bf16.xpose.msra.mxu0 0
        %743 = vmatprep.subr.bf16.mxu0 0
        %744 = vmatpush1.bf16.xpose.msra.mxu0 0
        %745 = vmatprep.subr.bf16.mxu0 0
        %746 = vmatpush1.bf16.xpose.msra.mxu0 0
        %747 = vmatprep.subr.bf16.mxu0 0
        %748 = vmatpush1.bf16.xpose.msra.mxu0 0
        %749 = vmatprep.subr.bf16.mxu0 0
        %750 = vmatpush1.bf16.xpose.msra.mxu0 0
        %751 = vmatprep.subr.bf16.mxu0 0
        %752 = vmatpush1.bf16.xpose.msra.mxu0 0
        %753 = vmatprep.subr.bf16.mxu0 0
        %754 = vmatpush1.bf16.xpose.msra.mxu0 0
        %755 = vmatprep.subr.bf16.mxu0 0
        %756 = vmatpush1.bf16.xpose.msra.mxu0 0
        %757 = vmatprep.subr.bf16.mxu0 0
        %758 = vmatpush1.bf16.xpose.msra.mxu0 0
        %759 = vmatprep.subr.bf16.mxu0 0
        %760 = vmatpush1.bf16.xpose.msra.mxu0 0
        %761 = vmatprep.subr.bf16.mxu0 0
        %762 = vmatpush1.bf16.xpose.msra.mxu0 0
        %763 = vmatprep.subr.bf16.mxu0 0
        %764 = vmatpush1.bf16.xpose.msra.mxu0 0
        %765 = vmatprep.subr.bf16.mxu0 0
        %766 = vmatpush1.bf16.xpose.msra.mxu0 0
        %767 = vmatprep.subr.bf16.mxu0 0
        %768 = vmatpush1.bf16.xpose.msra.mxu0 0
        %769 = vmatprep.subr.bf16.mxu0 0
        %770 = vmatpush1.bf16.xpose.msra.mxu0 0
        %771 = vmatprep.mubr.bf16.mxu0 0
        %772 = vmatmul.mubr.bf16.gmra.mrb[0].mxu0 %v734
        %v773 = vpop.f32.mrb[0].mxu0
        %v774 = vadd.f32 %v615, %v773
        %v775 = vpop.f32.mrb[0].mxu0
        %v776 = vpop.f32.mrb[0].mxu0
        %v777 = vpop.f32.mrb[0].mxu0
        %778 = vdwg.mxu0
        %v779 = vsel %vm616, %v774, -inf
        %780 = vmax.xlane.f32.xlu0 %v779
        %v781 = vpop.xlane.xlu0 %780
        %v782 = vsub.f32 %v774, %v781
        %v783 = vmul.f32 %v782, 1.442695
        %v784 = vpow.pop %v783
        %v785 = vsel %vm616, %v784, 0.0
        %786 = vadd.xlane.f32.xlu0 %v785
        %v787 = vpop.xlane.xlu0 %786
        %v788 = vrcp.pop %v787
        %v789 = vmul.f32 %v784, %v788
        %v790 = vpack.c.bf16 %v789, %v789
        %v792 = vunpack.c.l.b16 %v609
        %v793 = vpack.c.b16 %v792, %v792
        %794 = vrot.lane.b32.xlu0 %v793, 120
        %v795 = vpop.permute.xlu0 %794
        %v797 = vsel %vm616, %v790, 0
        %v800 = vsel %vm678, %v795, 0
        %802 = vmatprep.subr.bf16.mxu0 0
        %803 = vmatpush1.bf16.msra.mxu0 %v800
        %804 = vmatprep.subr.bf16.mxu0 0
        %805 = vmatpush1.bf16.msra.mxu0 0
        %806 = vmatprep.subr.bf16.mxu0 0
        %807 = vmatpush1.bf16.msra.mxu0 0
        %808 = vmatprep.subr.bf16.mxu0 0
        %809 = vmatpush1.bf16.msra.mxu0 0
        %810 = vmatprep.subr.bf16.mxu0 0
        %811 = vmatpush1.bf16.msra.mxu0 0
        %812 = vmatprep.subr.bf16.mxu0 0
        %813 = vmatpush1.bf16.msra.mxu0 0
        %814 = vmatprep.subr.bf16.mxu0 0
        %815 = vmatpush1.bf16.msra.mxu0 0
        %816 = vmatprep.subr.bf16.mxu0 0
        %817 = vmatpush1.bf16.msra.mxu0 0
        %818 = vmatprep.subr.bf16.mxu0 0
        %819 = vmatpush1.bf16.msra.mxu0 0
        %820 = vmatprep.subr.bf16.mxu0 0
        %821 = vmatpush1.bf16.msra.mxu0 0
        %822 = vmatprep.subr.bf16.mxu0 0
        %823 = vmatpush1.bf16.msra.mxu0 0
        %824 = vmatprep.subr.bf16.mxu0 0
        %825 = vmatpush1.bf16.msra.mxu0 0
        %826 = vmatprep.subr.bf16.mxu0 0
        %827 = vmatpush1.bf16.msra.mxu0 0
        %828 = vmatprep.subr.bf16.mxu0 0
        %829 = vmatpush1.bf16.msra.mxu0 0
        %830 = vmatprep.subr.bf16.mxu0 0
        %831 = vmatpush1.bf16.msra.mxu0 0
        %832 = vmatprep.subr.bf16.mxu0 0
        %833 = vmatpush1.bf16.msra.mxu0 0
        %834 = vmatprep.mubr.bf16.mxu0 0
        %835 = vmatmul.mubr.bf16.gmra.mrb[0].mxu0 %v797
        %v836 = vpop.f32.mrb[0].mxu0
        %v837 = vadd.f32 0.0, %v836
        %v838 = vpop.f32.mrb[0].mxu0
        %v839 = vpop.f32.mrb[0].mxu0
        %v840 = vpop.f32.mrb[0].mxu0
        %841 = vdwg.mxu0
        %v842 = vpack.c.bf16 %v837, %v837
        %v844 = vunpack.c.l.b16 %v842
        %v845 = vpack.c.b16 %v844, %v844
        %846 = vrot.lane.b32.xlu0 %v845, 8
        %v847 = vpop.permute.xlu0 %846
        %vm849 = vcmask 126016
        %850 = vst.msk [vmem:[#allocation4] sm:$0xf] %vm849, %v847
        %851 = vrot.lane.b32.xlu0 %v607, 112
        %v852 = vpop.permute.xlu0 %851
        %853 = vrot.lane.b32.xlu0 %v730, 112
        %v854 = vpop.permute.xlu0 %853
        %v856 = vsel %vm616, %v852, 0
        %v859 = vsel %vm616, %v854, 0
        %861 = vmatprep.subr.bf16.mxu0 0
        %862 = vmatpush1.bf16.xpose.msra.mxu0 %v859
        %863 = vmatprep.subr.bf16.mxu0 0
        %864 = vmatpush1.bf16.xpose.msra.mxu0 0
        %865 = vmatprep.subr.bf16.mxu0 0
        %866 = vmatpush1.bf16.xpose.msra.mxu0 0
        %867 = vmatprep.subr.bf16.mxu0 0
        %868 = vmatpush1.bf16.xpose.msra.mxu0 0
        %869 = vmatprep.subr.bf16.mxu0 0
        %870 = vmatpush1.bf16.xpose.msra.mxu0 0
        %871 = vmatprep.subr.bf16.mxu0 0
        %872 = vmatpush1.bf16.xpose.msra.mxu0 0
        %873 = vmatprep.subr.bf16.mxu0 0
        %874 = vmatpush1.bf16.xpose.msra.mxu0 0
        %875 = vmatprep.subr.bf16.mxu0 0
        %876 = vmatpush1.bf16.xpose.msra.mxu0 0
        %877 = vmatprep.subr.bf16.mxu0 0
        %878 = vmatpush1.bf16.xpose.msra.mxu0 0
        %879 = vmatprep.subr.bf16.mxu0 0
        %880 = vmatpush1.bf16.xpose.msra.mxu0 0
        %881 = vmatprep.subr.bf16.mxu0 0
        %882 = vmatpush1.bf16.xpose.msra.mxu0 0
        %883 = vmatprep.subr.bf16.mxu0 0
        %884 = vmatpush1.bf16.xpose.msra.mxu0 0
        %885 = vmatprep.subr.bf16.mxu0 0
        %886 = vmatpush1.bf16.xpose.msra.mxu0 0
        %887 = vmatprep.subr.bf16.mxu0 0
        %888 = vmatpush1.bf16.xpose.msra.mxu0 0
        %889 = vmatprep.subr.bf16.mxu0 0
        %890 = vmatpush1.bf16.xpose.msra.mxu0 0
        %891 = vmatprep.subr.bf16.mxu0 0
        %892 = vmatpush1.bf16.xpose.msra.mxu0 0
        %893 = vmatprep.mubr.bf16.mxu0 0
        %894 = vmatmul.mubr.bf16.gmra.mrb[0].mxu0 %v856
        %v895 = vpop.f32.mrb[0].mxu0
        %v896 = vadd.f32 %v615, %v895
        %v897 = vpop.f32.mrb[0].mxu0
        %v898 = vpop.f32.mrb[0].mxu0
        %v899 = vpop.f32.mrb[0].mxu0
        %900 = vdwg.mxu0
        %v901 = vsel %vm616, %v896, -inf
        %902 = vmax.xlane.f32.xlu0 %v901
        %v903 = vpop.xlane.xlu0 %902
        %v904 = vsub.f32 %v896, %v903
        %v905 = vmul.f32 %v904, 1.442695
        %v906 = vpow.pop %v905
        %v907 = vsel %vm616, %v906, 0.0
        %908 = vadd.xlane.f32.xlu0 %v907
        %v909 = vpop.xlane.xlu0 %908
        %v910 = vrcp.pop %v909
        %v911 = vmul.f32 %v906, %v910
        %v912 = vpack.c.bf16 %v911, %v911
        %913 = vrot.lane.b32.xlu0 %v793, 112
        %v914 = vpop.permute.xlu0 %913
        %v916 = vsel %vm616, %v912, 0
        %v919 = vsel %vm678, %v914, 0
        %921 = vmatprep.subr.bf16.mxu0 0
        %922 = vmatpush1.bf16.msra.mxu0 %v919
        %923 = vmatprep.subr.bf16.mxu0 0
        %924 = vmatpush1.bf16.msra.mxu0 0
        %925 = vmatprep.subr.bf16.mxu0 0
        %926 = vmatpush1.bf16.msra.mxu0 0
        %927 = vmatprep.subr.bf16.mxu0 0
        %928 = vmatpush1.bf16.msra.mxu0 0
        %929 = vmatprep.subr.bf16.mxu0 0
        %930 = vmatpush1.bf16.msra.mxu0 0
        %931 = vmatprep.subr.bf16.mxu0 0
        %932 = vmatpush1.bf16.msra.mxu0 0
        %933 = vmatprep.subr.bf16.mxu0 0
        %934 = vmatpush1.bf16.msra.mxu0 0
        %935 = vmatprep.subr.bf16.mxu0 0
        %936 = vmatpush1.bf16.msra.mxu0 0
        %937 = vmatprep.subr.bf16.mxu0 0
        %938 = vmatpush1.bf16.msra.mxu0 0
        %939 = vmatprep.subr.bf16.mxu0 0
        %940 = vmatpush1.bf16.msra.mxu0 0
        %941 = vmatprep.subr.bf16.mxu0 0
        %942 = vmatpush1.bf16.msra.mxu0 0
        %943 = vmatprep.subr.bf16.mxu0 0
        %944 = vmatpush1.bf16.msra.mxu0 0
        %945 = vmatprep.subr.bf16.mxu0 0
        %946 = vmatpush1.bf16.msra.mxu0 0
        %947 = vmatprep.subr.bf16.mxu0 0
        %948 = vmatpush1.bf16.msra.mxu0 0
        %949 = vmatprep.subr.bf16.mxu0 0
        %950 = vmatpush1.bf16.msra.mxu0 0
        %951 = vmatprep.subr.bf16.mxu0 0
        %952 = vmatpush1.bf16.msra.mxu0 0
        %953 = vmatprep.mubr.bf16.mxu0 0
        %954 = vmatmul.mubr.bf16.gmra.mrb[0].mxu0 %v916
        %v955 = vpop.f32.mrb[0].mxu0
        %v956 = vadd.f32 0.0, %v955
        %v957 = vpop.f32.mrb[0].mxu0
        %v958 = vpop.f32.mrb[0].mxu0
        %v959 = vpop.f32.mrb[0].mxu0
        %960 = vdwg.mxu0
        %v961 = vpack.c.bf16 %v956, %v956
        %v963 = vunpack.c.l.b16 %v961
        %v964 = vpack.c.b16 %v963, %v963
        %965 = vrot.lane.b32.xlu0 %v964, 16
        %v966 = vpop.permute.xlu0 %965
        %vm968 = vcmask 191616
        %969 = vst.msk [vmem:[#allocation4] sm:$0xf] %vm968, %v966
        %970 = vrot.lane.b32.xlu0 %v607, 104
        %v971 = vpop.permute.xlu0 %970
        %972 = vrot.lane.b32.xlu0 %v730, 104
        %v973 = vpop.permute.xlu0 %972
        %v975 = vsel %vm616, %v971, 0
        %v978 = vsel %vm616, %v973, 0
        %980 = vmatprep.subr.bf16.mxu0 0
        %981 = vmatpush1.bf16.xpose.msra.mxu0 %v978
        %982 = vmatprep.subr.bf16.mxu0 0
        %983 = vmatpush1.bf16.xpose.msra.mxu0 0
        %984 = vmatprep.subr.bf16.mxu0 0
        %985 = vmatpush1.bf16.xpose.msra.mxu0 0
        %986 = vmatprep.subr.bf16.mxu0 0
        %987 = vmatpush1.bf16.xpose.msra.mxu0 0
        %988 = vmatprep.subr.bf16.mxu0 0
        %989 = vmatpush1.bf16.xpose.msra.mxu0 0
        %990 = vmatprep.subr.bf16.mxu0 0
        %991 = vmatpush1.bf16.xpose.msra.mxu0 0
        %992 = vmatprep.subr.bf16.mxu0 0
        %993 = vmatpush1.bf16.xpose.msra.mxu0 0
        %994 = vmatprep.subr.bf16.mxu0 0
        %995 = vmatpush1.bf16.xpose.msra.mxu0 0
        %996 = vmatprep.subr.bf16.mxu0 0
        %997 = vmatpush1.bf16.xpose.msra.mxu0 0
        %998 = vmatprep.subr.bf16.mxu0 0
        %999 = vmatpush1.bf16.xpose.msra.mxu0 0
        %1000 = vmatprep.subr.bf16.mxu0 0
        %1001 = vmatpush1.bf16.xpose.msra.mxu0 0
        %1002 = vmatprep.subr.bf16.mxu0 0
        %1003 = vmatpush1.bf16.xpose.msra.mxu0 0
        %1004 = vmatprep.subr.bf16.mxu0 0
        %1005 = vmatpush1.bf16.xpose.msra.mxu0 0
        %1006 = vmatprep.subr.bf16.mxu0 0
        %1007 = vmatpush1.bf16.xpose.msra.mxu0 0
        %1008 = vmatprep.subr.bf16.mxu0 0
        %1009 = vmatpush1.bf16.xpose.msra.mxu0 0
        %1010 = vmatprep.subr.bf16.mxu0 0
        %1011 = vmatpush1.bf16.xpose.msra.mxu0 0
        %1012 = vmatprep.mubr.bf16.mxu0 0
        %1013 = vmatmul.mubr.bf16.gmra.mrb[0].mxu0 %v975
        %v1014 = vpop.f32.mrb[0].mxu0
        %v1015 = vadd.f32 %v615, %v1014
        %v1016 = vpop.f32.mrb[0].mxu0
        %v1017 = vpop.f32.mrb[0].mxu0
        %v1018 = vpop.f32.mrb[0].mxu0
        %1019 = vdwg.mxu0
        %v1020 = vsel %vm616, %v1015, -inf
        %1021 = vmax.xlane.f32.xlu0 %v1020
        %v1022 = vpop.xlane.xlu0 %1021
        %v1023 = vsub.f32 %v1015, %v1022
        %v1024 = vmul.f32 %v1023, 1.442695
        %v1025 = vpow.pop %v1024
        %v1026 = vsel %vm616, %v1025, 0.0
        %1027 = vadd.xlane.f32.xlu0 %v1026
        %v1028 = vpop.xlane.xlu0 %1027
        %v1029 = vrcp.pop %v1028
        %v1030 = vmul.f32 %v1025, %v1029
        %v1031 = vpack.c.bf16 %v1030, %v1030
        %1032 = vrot.lane.b32.xlu0 %v793, 104
        %v1033 = vpop.permute.xlu0 %1032
        %v1035 = vsel %vm616, %v1031, 0
        %v1038 = vsel %vm678, %v1033, 0
        %1040 = vmatprep.subr.bf16.mxu0 0
        %1041 = vmatpush1.bf16.msra.mxu0 %v1038
        %1042 = vmatprep.subr.bf16.mxu0 0
        %1043 = vmatpush1.bf16.msra.mxu0 0
        %1044 = vmatprep.subr.bf16.mxu0 0
        %1045 = vmatpush1.bf16.msra.mxu0 0
        %1046 = vmatprep.subr.bf16.mxu0 0
        %1047 = vmatpush1.bf16.msra.mxu0 0
        %1048 = vmatprep.subr.bf16.mxu0 0
        %1049 = vmatpush1.bf16.msra.mxu0 0
        %1050 = vmatprep.subr.bf16.mxu0 0
        %1051 = vmatpush1.bf16.msra.mxu0 0
        %1052 = vmatprep.subr.bf16.mxu0 0
        %1053 = vmatpush1.bf16.msra.mxu0 0
        %1054 = vmatprep.subr.bf16.mxu0 0
        %1055 = vmatpush1.bf16.msra.mxu0 0
        %1056 = vmatprep.subr.bf16.mxu0 0
        %1057 = vmatpush1.bf16.msra.mxu0 0
        %1058 = vmatprep.subr.bf16.mxu0 0
        %1059 = vmatpush1.bf16.msra.mxu0 0
        %1060 = vmatprep.subr.bf16.mxu0 0
        %1061 = vmatpush1.bf16.msra.mxu0 0
        %1062 = vmatprep.subr.bf16.mxu0 0
        %1063 = vmatpush1.bf16.msra.mxu0 0
        %1064 = vmatprep.subr.bf16.mxu0 0
        %1065 = vmatpush1.bf16.msra.mxu0 0
        %1066 = vmatprep.subr.bf16.mxu0 0
        %1067 = vmatpush1.bf16.msra.mxu0 0
        %1068 = vmatprep.subr.bf16.mxu0 0
        %1069 = vmatpush1.bf16.msra.mxu0 0
        %1070 = vmatprep.subr.bf16.mxu0 0
        %1071 = vmatpush1.bf16.msra.mxu0 0
        %1072 = vmatprep.mubr.bf16.mxu0 0
        %1073 = vmatmul.mubr.bf16.gmra.mrb[0].mxu0 %v1035
        %v1074 = vpop.f32.mrb[0].mxu0
        %v1075 = vadd.f32 0.0, %v1074
        %v1076 = vpop.f32.mrb[0].mxu0
        %v1077 = vpop.f32.mrb[0].mxu0
        %v1078 = vpop.f32.mrb[0].mxu0
        %1079 = vdwg.mxu0
        %v1080 = vpack.c.bf16 %v1075, %v1075
        %v1082 = vunpack.c.l.b16 %v1080
        %v1083 = vpack.c.b16 %v1082, %v1082
        %1084 = vrot.lane.b32.xlu0 %v1083, 24
        %v1085 = vpop.permute.xlu0 %1084
        %vm1087 = vcmask 257216
        %1088 = vst.msk [vmem:[#allocation4] sm:$0xf] %vm1087, %v1085
        %v1089 = vld [vmem:[#allocation4] sm:$0xf]
        %v1090 = vld [vmem:[#allocation11] sm:$0xf]
        %v1091 = vld [vmem:[#allocation11 + $0x4] sm:$0xf]
        %v1092 = vld [vmem:[#allocation11 + $0x8] sm:$0xf]
        %v1093 = vld [vmem:[#allocation11 + $0xc] sm:$0xf]
        %v1094 = vld [vmem:[%s7] sm:$0x1]
        %v1096 = vlaneseq
        %v1097 = vshrl.u32 %v1096, 7
        %v1098 = vsub.s32 0, %v1097
        %v1099 = vrot.slane %v1094, %v1098
        %v1105 = vunpack.c.l.b16 %v1090
        %v1106 = vunpack.c.l.b16 %v1091
        %v1107 = vunpack.c.l.b16 %v1092
        %v1108 = vunpack.c.l.b16 %v1093
        %v1109 = vpack.c.b16 %v1106, %v1105
        %v1110 = vpack.c.b16 %v1108, %v1107
        %v1114 = vsel %vm562, %v1089, 0
        %1116 = vmatprep.subr.bf16.mxu0 0
        %1117 = vmatpush1.bf16.msra.mxu0 %v1109
        %1118 = vmatprep.subr.bf16.mxu0 0
        %1119 = vmatpush1.bf16.msra.mxu0 %v1110
        %1120 = vmatprep.subr.bf16.mxu0 0
        %1121 = vmatpush1.bf16.msra.mxu0 0
        %1122 = vmatprep.subr.bf16.mxu0 0
        %1123 = vmatpush1.bf16.msra.mxu0 0
        %1124 = vmatprep.subr.bf16.mxu0 0
        %1125 = vmatpush1.bf16.msra.mxu0 0
        %1126 = vmatprep.subr.bf16.mxu0 0
        %1127 = vmatpush1.bf16.msra.mxu0 0
        %1128 = vmatprep.subr.bf16.mxu0 0
        %1129 = vmatpush1.bf16.msra.mxu0 0
        %1130 = vmatprep.subr.bf16.mxu0 0
        %1131 = vmatpush1.bf16.msra.mxu0 0
        %1132 = vmatprep.subr.bf16.mxu0 0
        %1133 = vmatpush1.bf16.msra.mxu0 0
        %1134 = vmatprep.subr.bf16.mxu0 0
        %1135 = vmatpush1.bf16.msra.mxu0 0
        %1136 = vmatprep.subr.bf16.mxu0 0
        %1137 = vmatpush1.bf16.msra.mxu0 0
        %1138 = vmatprep.subr.bf16.mxu0 0
        %1139 = vmatpush1.bf16.msra.mxu0 0
        %1140 = vmatprep.subr.bf16.mxu0 0
        %1141 = vmatpush1.bf16.msra.mxu0 0
        %1142 = vmatprep.subr.bf16.mxu0 0
        %1143 = vmatpush1.bf16.msra.mxu0 0
        %1144 = vmatprep.subr.bf16.mxu0 0
        %1145 = vmatpush1.bf16.msra.mxu0 0
        %1146 = vmatprep.subr.bf16.mxu0 0
        %1147 = vmatpush1.bf16.msra.mxu0 0
        %1148 = vmatprep.mubr.bf16.mxu0 0
        %1149 = vmatmul.mubr.bf16.gmra.mrb[0].mxu0 %v1114
        %v1150 = vpop.f32.mrb[0].mxu0
        %v1151 = vadd.f32 %v1099, %v1150
        %v1152 = vpop.f32.mrb[0].mxu0
        %v1153 = vpop.f32.mrb[0].mxu0
        %v1154 = vpop.f32.mrb[0].mxu0
        %1155 = vdwg.mxu0
        %1156 = vst.msk [vmem:[%s402] sm:$0xff] %vm562, %v1151
        %s1157 = sand.u32 %s239, 1
        %s1158 = scalar_lea.sflag [#allocation7], %s1157
        %s1159 = sand.u32 %s239, 1
        %s1160 = smul.addr %s1159, 8
        %s1161 = scalar_lea.vmem [#allocation13], %s1160
        // Predicated region
        $region73: #{tpu_custom_call.1} parent=51 // pred_check
          %p1162 = pneg %p249
        $region74: #{tpu_custom_call.1} parent=51 // pred_check_branch
          %1164 = sbr.rel (%p1162) target = $region76
        $region75: #{tpu_custom_call.1} parent=51 // pred_region
          %s1166 = ssub.s32 128, 128
          %1167 = vsyncadd %s1158, %s1166
          %s1168 = sadd.s32 %s32, %s31
          %s1169 = smul.addr %s1168, 128
          %s1170 = scalar_lea.hbm %s8, %s1169
          %s1172 = sshll.u32 %s1161, 4
          %s1173 = int_to_ptr.vmem [resolvable:$true] %s1172
          %1175 = dma.vmem_to_hbm [thread:$0]  %s1173, 128, %s1170, %s1158
        $region76: #{tpu_custom_call.1} parent=51 // pred_fallthru
          _
      $region52: #{tpu_custom_call.1} parent=5 // pred_fallthru
        _
      %p1176 = scmp.le.s32.totalorder 2, %s22
      // Predicated region
      $region77: #{tpu_custom_call.1} parent=5 // pred_check
        %p1177 = pneg %p1176
      $region78: #{tpu_custom_call.1} parent=5 // pred_check_branch
        %1179 = sbr.rel (%p1177) target = $region80
      $region79: #{tpu_custom_call.1} parent=5 // pred_region
        %s1180 = ssub.s32 %s22, 2
        // Predicated region
        $region81: #{tpu_custom_call.1} parent=79 // pred_check
          %p1181 = pneg %p255
        $region82: #{tpu_custom_call.1} parent=79 // pred_check_branch
          %1183 = sbr.rel (%p1181) target = $region84
        $region83: #{tpu_custom_call.1} parent=79 // pred_region
          %s1184 = sand.u32 %s240, 1
          %s1185 = scalar_lea.sflag [#allocation7], %s1184
          %s1186 = sand.u32 %s240, 1
          %s1187 = smul.addr %s1186, 8
          %s1188 = scalar_lea.vmem [#allocation13], %s1187
          %1189 = dma.done %s1185, 128
        $region84: #{tpu_custom_call.1} parent=79 // pred_fallthru
          _
      $region80: #{tpu_custom_call.1} parent=5 // pred_fallthru
        _
    $region6: #{tpu_custom_call.1} parent=1 // loop_footer
      %s26 = sadd.s32 1, %s22
    $region7: #{tpu_custom_call.1} parent=1 // loop_footer_branch
      %21 = sbr.rel target = $region3
    $region8: #{tpu_custom_call.1} parent=1 // loop_exit
      _
    %1190 = vsyncpa [#allocation6], 1
    %s1191 = scalar_lea.sflag [#allocation6], 1
    %1192 = vsyncpa %s1191, 1
    %1193 = vsyncpa [#allocation9], 1
    %1194 = vsyncpa [#allocation12], 1
    %1195 = vsyncpa [#allocation7], 1
    %s1196 = scalar_lea.sflag [#allocation7], 1
    %1197 = vsyncpa %s1196, 1

</llo_original>
